<compile_context>
chip_gen: v5e
topology: v5e:2x2
jax: 0.10.0
libtpu: 0.0.40
codegen_flags: <defaults>
</compile_context>

<pallas_src>
import functools
import math

import jax
import jax.numpy as jnp
from jax.experimental import pallas as pl
from jax.experimental.pallas import tpu as pltpu

# ------------------------- synthetic model config ---------------------------
VOCAB = 100
MAX_POS = 16
HIDDEN = 32          # bert hidden_size (small synthetic stand-in)
NUM_HEADS = 2
HEAD_DIM = HIDDEN // NUM_HEADS
NUM_LAYERS = 2
INTERMEDIATE = 64
NUM_LABELS = 24      # as in the PyTorch module
CLS_HIDDEN = 128     # classifier hidden width, as in the PyTorch module
LN_EPS = 1e-12


# ------------------------------ fused kernel --------------------------------
def _fused_kernel(emb_ref, bias_ref, eln_g_ref, eln_b_ref,
                  qkv_w_ref, qkv_b_ref, ao_w_ref, ao_b_ref,
                  aln_g_ref, aln_b_ref,
                  w1_ref, b1_ref, w2_ref, b2_ref,
                  fln_g_ref, fln_b_ref,
                  cw1_ref, cb1_ref, cw2_ref, cb2_ref,
                  o_ref,
                  ctx_ref,
                  *, S, num_heads, head_dim, num_layers, scale):
    H = num_heads * head_dim

    def ln(x, g, b):
        mu = jnp.mean(x, axis=-1, keepdims=True)
        var = jnp.mean(jnp.square(x - mu), axis=-1, keepdims=True)
        return (x - mu) * jax.lax.rsqrt(var + LN_EPS) * g + b

    # ---- embedding LayerNorm (this grid step's batch row block) ----
    x = ln(emb_ref[0], eln_g_ref[...], eln_b_ref[...])            # (S, H) f32

    # additive attention-mask bias, hoisted out of the layer/head loops
    bias = bias_ref[0]                                            # (1, S) f32

    # ---- encoder layers: statically unrolled over VMEM-resident weight stacks ----
    for l in range(num_layers):
        # fused QKV projection (bf16 operands, f32 accumulation)
        qkv = jnp.dot(x.astype(jnp.bfloat16), qkv_w_ref[l],
                      preferred_element_type=jnp.float32) + qkv_b_ref[l]   # (S, 3H)

        # per-head attention; head outputs go straight into their ctx column slice
        for h in range(num_heads):
            c0 = h * head_dim
            q = qkv[:, c0:c0 + head_dim].astype(jnp.bfloat16)                      # (S, Dh)
            k = qkv[:, H + c0:H + c0 + head_dim].astype(jnp.bfloat16)              # (S, Dh)
            v = qkv[:, 2 * H + c0:2 * H + c0 + head_dim].astype(jnp.bfloat16)      # (S, Dh)
            # contract on the shared head dim -> no explicit k.T transpose
            s = jax.lax.dot_general(q, k, (((1,), (1,)), ((), ())),
                                    preferred_element_type=jnp.float32)
            s = s * scale + bias
            s = s - jnp.max(s, axis=-1, keepdims=True)
            p = jnp.exp(s)
            p = p * pl.reciprocal(jnp.sum(p, axis=-1, keepdims=True), approx=False)
            ctx_ref[:, c0:c0 + head_dim] = jnp.dot(
                p.astype(jnp.bfloat16), v, preferred_element_type=jnp.float32)

        attn_out = jnp.dot(ctx_ref[...].astype(jnp.bfloat16), ao_w_ref[l],
                           preferred_element_type=jnp.float32) + ao_b_ref[l]
        x = ln(x + attn_out, aln_g_ref[l], aln_b_ref[l])          # residual fused into LN

        # feed forward
        hmid = jnp.dot(x.astype(jnp.bfloat16), w1_ref[l],
                       preferred_element_type=jnp.float32) + b1_ref[l]
        # TODO(synk): HF BERT uses erf-based GELU; tanh approximation used for
        # guaranteed Mosaic lowering (numerically ~1e-3 relative difference).
        hmid = 0.5 * hmid * (1.0 + jnp.tanh(0.7978845608028654 *
                                            (hmid + 0.044715 * hmid * hmid * hmid)))
        ffn = jnp.dot(hmid.astype(jnp.bfloat16), w2_ref[l],
                      preferred_element_type=jnp.float32) + b2_ref[l]
        x = ln(x + ffn, fln_g_ref[l], fln_b_ref[l])               # residual fused into LN

    # ---- mean-pool over ALL seq positions (matches torch.mean(dim=1)) + classifier head ----
    pooled = jnp.mean(x, axis=0, keepdims=True)                   # (1, H)
    z = jnp.dot(pooled.astype(jnp.bfloat16), cw1_ref[...],
                preferred_element_type=jnp.float32) + cb1_ref[...]
    z = jnp.maximum(z, 0.0)                                       # ReLU; Dropout(0.3) = id at inference
    o_ref[0] = jnp.dot(z.astype(jnp.bfloat16), cw2_ref[...],
                       preferred_element_type=jnp.float32) + cb2_ref[...]


def fused_bert_encoder_classifier(emb3d, mask_bias, p, *, B, S):
    H, I, C1, C2 = HIDDEN, INTERMEDIATE, CLS_HIDDEN, NUM_LABELS
    L = p["qkv_w"].shape[0]

    def full(shape):
        n = len(shape)
        return pl.BlockSpec(shape, lambda b, _n=n: (0,) * _n)

    kernel = functools.partial(_fused_kernel, S=S,
                               num_heads=NUM_HEADS, head_dim=HEAD_DIM,
                               num_layers=L, scale=1.0 / math.sqrt(HEAD_DIM))
    out = pl.pallas_call(
        kernel,
        out_shape=jax.ShapeDtypeStruct((B, 1, C2), jnp.float32),
        grid=(B,),
        in_specs=[
            pl.BlockSpec((1, S, H), lambda b: (b, 0, 0)),   # embeddings (pre-LN), per batch
            pl.BlockSpec((1, 1, S), lambda b: (b, 0, 0)),   # additive attention-mask bias
            full((1, H)), full((1, H)),                     # embedding LN gamma/beta
            full((L, H, 3 * H)), full((L, 1, 3 * H)),       # fused QKV weight / bias
            full((L, H, H)), full((L, 1, H)),               # attention output proj
            full((L, 1, H)), full((L, 1, H)),               # attn LN gamma/beta
            full((L, H, I)), full((L, 1, I)),               # FFN w1 / b1
            full((L, I, H)), full((L, 1, H)),               # FFN w2 / b2
            full((L, 1, H)), full((L, 1, H)),               # FFN LN gamma/beta
            full((H, C1)), full((1, C1)),                   # classifier layer 1
            full((C1, C2)), full((1, C2)),                  # classifier layer 2
        ],
        out_specs=pl.BlockSpec((1, 1, C2), lambda b: (b, 0, 0)),
        scratch_shapes=[pltpu.VMEM((S, H), jnp.float32)],   # per-step attention ctx buffer
        compiler_params=pltpu.CompilerParams(dimension_semantics=("parallel",)),
    )(emb3d, mask_bias,
      p["emb_ln_g"], p["emb_ln_b"],
      p["qkv_w"], p["qkv_b"], p["ao_w"], p["ao_b"],
      p["attn_ln_g"], p["attn_ln_b"],
      p["w1"], p["b1"], p["w2"], p["b2"],
      p["ffn_ln_g"], p["ffn_ln_b"],
      p["cls_w1"], p["cls_b1"], p["cls_w2"], p["cls_b2"])
    return out.reshape(B, C2)


# ----------------------------- parameter init -------------------------------
def init_params(key):
    # Deterministic synthetic weights (stand-in for the pretrained SapBERT checkpoint),
    # pre-stacked along a leading NUM_LAYERS axis; matmul weights stored in bf16,
    # biases and LayerNorm params in f32.
    def nrm(k, shape, std=0.02, dtype=jnp.bfloat16):
        return (std * jax.random.normal(k, shape, dtype=jnp.float32)).astype(dtype)

    keys = iter(jax.random.split(key, 64))
    H, I, L = HIDDEN, INTERMEDIATE, NUM_LAYERS
    p = {
        "word_emb": nrm(next(keys), (VOCAB, H), dtype=jnp.float32),
        "pos_emb":  nrm(next(keys), (MAX_POS, H), dtype=jnp.float32),
        "type_emb": nrm(next(keys), (2, H), dtype=jnp.float32),
        "emb_ln_g": jnp.ones((1, H), jnp.float32),
        "emb_ln_b": jnp.zeros((1, H), jnp.float32),
        # per-layer stacks (fused q|k|v along the output dim), bf16 matmul operands
        "qkv_w": nrm(next(keys), (L, H, 3 * H)),
        "qkv_b": jnp.zeros((L, 1, 3 * H), jnp.float32),
        "ao_w":  nrm(next(keys), (L, H, H)),
        "ao_b":  jnp.zeros((L, 1, H), jnp.float32),
        "attn_ln_g": jnp.ones((L, 1, H), jnp.float32),
        "attn_ln_b": jnp.zeros((L, 1, H), jnp.float32),
        "w1": nrm(next(keys), (L, H, I)),
        "b1": jnp.zeros((L, 1, I), jnp.float32),
        "w2": nrm(next(keys), (L, I, H)),
        "b2": jnp.zeros((L, 1, H), jnp.float32),
        "ffn_ln_g": jnp.ones((L, 1, H), jnp.float32),
        "ffn_ln_b": jnp.zeros((L, 1, H), jnp.float32),
        # classifier head
        "cls_w1": nrm(next(keys), (H, CLS_HIDDEN)),
        "cls_b1": jnp.zeros((1, CLS_HIDDEN), jnp.float32),
        "cls_w2": nrm(next(keys), (CLS_HIDDEN, NUM_LABELS)),
        "cls_b2": jnp.zeros((1, NUM_LABELS), jnp.float32),
    }
    return p


# ------------------------------ forward pass --------------------------------
@jax.jit
def bert_classifier_forward(params, input_ids, attention_mask):
    B, S = input_ids.shape
    # Embedding gathers + adds (data-dependent, kept as plain-JAX glue).
    # TODO(synk): token_type_ids hard-coded to type 0 (matches the synthetic setup).
    emb3d = (params["word_emb"][input_ids]
             + params["pos_emb"][jnp.arange(S)][None, :, :]
             + params["type_emb"][0][None, None, :]).astype(jnp.float32)   # (B, S, H)
    # Additive attention-mask bias, head/layer invariant, computed once, pre-shaped (B,1,S).
    # NOTE: mean pooling over ALL seq positions (incl. padding) matches torch.mean(dim=1).
    mask_bias = ((1.0 - attention_mask.astype(jnp.float32)) * (-1e9)).reshape(B, 1, S)
    return fused_bert_encoder_classifier(emb3d, mask_bias, params, B=B, S=S)


# --------------------------------- main --------------------------------------
if __name__ == "__main__":
    key = jax.random.PRNGKey(0)
    k_param, k_ids = jax.random.split(key)

    B, S = 2, 8
    params = init_params(k_param)
    input_ids = jax.random.randint(k_ids, (B, S), 0, VOCAB, dtype=jnp.int32)
    # second example has its last two positions masked out
    attention_mask = jnp.array([[1, 1, 1, 1, 1, 1, 1, 1],
                                [1, 1, 1, 1, 1, 1, 0, 0]], dtype=jnp.int32)

    logits = bert_classifier_forward(params, input_ids, attention_mask)
    jax.block_until_ready(logits)
    assert logits.shape == (B, NUM_LABELS) and logits.dtype == jnp.float32
    assert bool(jnp.all(jnp.isfinite(logits)))
    print("KERNEL_OK")
</pallas_src>

<mosaic_0001>
module attributes {stable_mosaic.version = 11 : i64} {
  func.func @_fused_kernel(%arg0: i32, %arg1: memref<1x8x32xf32, #tpu.memory_space<vmem>>, %arg2: memref<1x1x8xf32, #tpu.memory_space<vmem>>, %arg3: memref<1x32xf32, #tpu.memory_space<vmem>>, %arg4: memref<1x32xf32, #tpu.memory_space<vmem>>, %arg5: memref<2x32x96xbf16, #tpu.memory_space<vmem>>, %arg6: memref<2x1x96xf32, #tpu.memory_space<vmem>>, %arg7: memref<2x32x32xbf16, #tpu.memory_space<vmem>>, %arg8: memref<2x1x32xf32, #tpu.memory_space<vmem>>, %arg9: memref<2x1x32xf32, #tpu.memory_space<vmem>>, %arg10: memref<2x1x32xf32, #tpu.memory_space<vmem>>, %arg11: memref<2x32x64xbf16, #tpu.memory_space<vmem>>, %arg12: memref<2x1x64xf32, #tpu.memory_space<vmem>>, %arg13: memref<2x64x32xbf16, #tpu.memory_space<vmem>>, %arg14: memref<2x1x32xf32, #tpu.memory_space<vmem>>, %arg15: memref<2x1x32xf32, #tpu.memory_space<vmem>>, %arg16: memref<2x1x32xf32, #tpu.memory_space<vmem>>, %arg17: memref<32x128xbf16, #tpu.memory_space<vmem>>, %arg18: memref<1x128xf32, #tpu.memory_space<vmem>>, %arg19: memref<128x24xbf16, #tpu.memory_space<vmem>>, %arg20: memref<1x24xf32, #tpu.memory_space<vmem>>, %arg21: memref<1x1x24xf32, #tpu.memory_space<vmem>>, %arg22: memref<8x32xf32, #tpu.memory_space<vmem>>) attributes {dimension_semantics = [#tpu.dimension_semantics<parallel>], iteration_bounds = array<i64: 2>, scalar_prefetch = 0 : i64, scratch_operands = 1 : i64, tpu.core_type = #tpu.core_type<tc>, window_params = [{transform_indices = @transform_0, window_bounds = array<i64: 1, 8, 32>}, {transform_indices = @transform_1, window_bounds = array<i64: 1, 1, 8>}, {pipeline_mode = #tpu.pipeline_mode<synchronous>, transform_indices = @transform_2, window_bounds = array<i64: 1, 32>}, {pipeline_mode = #tpu.pipeline_mode<synchronous>, transform_indices = @transform_3, window_bounds = array<i64: 1, 32>}, {pipeline_mode = #tpu.pipeline_mode<synchronous>, transform_indices = @transform_4, window_bounds = array<i64: 2, 32, 96>}, {pipeline_mode = #tpu.pipeline_mode<synchronous>, transform_indices = @transform_5, window_bounds = array<i64: 2, 1, 96>}, {pipeline_mode = #tpu.pipeline_mode<synchronous>, transform_indices = @transform_6, window_bounds = array<i64: 2, 32, 32>}, {pipeline_mode = #tpu.pipeline_mode<synchronous>, transform_indices = @transform_7, window_bounds = array<i64: 2, 1, 32>}, {pipeline_mode = #tpu.pipeline_mode<synchronous>, transform_indices = @transform_8, window_bounds = array<i64: 2, 1, 32>}, {pipeline_mode = #tpu.pipeline_mode<synchronous>, transform_indices = @transform_9, window_bounds = array<i64: 2, 1, 32>}, {pipeline_mode = #tpu.pipeline_mode<synchronous>, transform_indices = @transform_10, window_bounds = array<i64: 2, 32, 64>}, {pipeline_mode = #tpu.pipeline_mode<synchronous>, transform_indices = @transform_11, window_bounds = array<i64: 2, 1, 64>}, {pipeline_mode = #tpu.pipeline_mode<synchronous>, transform_indices = @transform_12, window_bounds = array<i64: 2, 64, 32>}, {pipeline_mode = #tpu.pipeline_mode<synchronous>, transform_indices = @transform_13, window_bounds = array<i64: 2, 1, 32>}, {pipeline_mode = #tpu.pipeline_mode<synchronous>, transform_indices = @transform_14, window_bounds = array<i64: 2, 1, 32>}, {pipeline_mode = #tpu.pipeline_mode<synchronous>, transform_indices = @transform_15, window_bounds = array<i64: 2, 1, 32>}, {pipeline_mode = #tpu.pipeline_mode<synchronous>, transform_indices = @transform_16, window_bounds = array<i64: 32, 128>}, {pipeline_mode = #tpu.pipeline_mode<synchronous>, transform_indices = @transform_17, window_bounds = array<i64: 1, 128>}, {pipeline_mode = #tpu.pipeline_mode<synchronous>, transform_indices = @transform_18, window_bounds = array<i64: 128, 24>}, {pipeline_mode = #tpu.pipeline_mode<synchronous>, transform_indices = @transform_19, window_bounds = array<i64: 1, 24>}, {transform_indices = @transform_20, window_bounds = array<i64: 1, 1, 24>}]} {
    %c0 = arith.constant 0 : index
    %c0_0 = arith.constant 0 : index
    %c0_1 = arith.constant 0 : index
    %0 = vector.load %arg1[%c0, %c0_0, %c0_1] : memref<1x8x32xf32, #tpu.memory_space<vmem>>, vector<1x8x32xf32>
    %1 = vector.shape_cast %0 : vector<1x8x32xf32> to vector<8x32xf32>
    %c0_2 = arith.constant 0 : index
    %c0_3 = arith.constant 0 : index
    %2 = vector.load %arg3[%c0_2, %c0_3] : memref<1x32xf32, #tpu.memory_space<vmem>>, vector<1x32xf32>
    %c0_4 = arith.constant 0 : index
    %c0_5 = arith.constant 0 : index
    %3 = vector.load %arg4[%c0_4, %c0_5] : memref<1x32xf32, #tpu.memory_space<vmem>>, vector<1x32xf32>
    %cst = arith.constant dense<0.000000e+00> : vector<8xf32>
    %4 = vector.multi_reduction <add>, %1, %cst [1] : vector<8x32xf32> to vector<8xf32>
    %5 = vector.shape_cast %4 : vector<8xf32> to vector<8x1xf32>
    %cst_6 = arith.constant 3.200000e+01 : f32
    %6 = vector.broadcast %cst_6 : f32 to vector<8x1xf32>
    %7 = arith.divf %5, %6 : vector<8x1xf32>
    %8 = vector.broadcast %7 : vector<8x1xf32> to vector<8x32xf32>
    %9 = arith.subf %1, %8 : vector<8x32xf32>
    %10 = arith.mulf %9, %9 : vector<8x32xf32>
    %cst_7 = arith.constant dense<0.000000e+00> : vector<8xf32>
    %11 = vector.multi_reduction <add>, %10, %cst_7 [1] : vector<8x32xf32> to vector<8xf32>
    %12 = vector.shape_cast %11 : vector<8xf32> to vector<8x1xf32>
    %cst_8 = arith.constant 3.200000e+01 : f32
    %13 = vector.broadcast %cst_8 : f32 to vector<8x1xf32>
    %14 = arith.divf %12, %13 : vector<8x1xf32>
    %15 = vector.broadcast %7 : vector<8x1xf32> to vector<8x32xf32>
    %16 = arith.subf %1, %15 : vector<8x32xf32>
    %cst_9 = arith.constant 9.99999996E-13 : f32
    %17 = vector.broadcast %cst_9 : f32 to vector<8x1xf32>
    %18 = arith.addf %14, %17 : vector<8x1xf32>
    %19 = math.rsqrt %18 : vector<8x1xf32>
    %20 = vector.broadcast %19 : vector<8x1xf32> to vector<8x32xf32>
    %21 = arith.mulf %16, %20 : vector<8x32xf32>
    %22 = vector.broadcast %2 : vector<1x32xf32> to vector<8x32xf32>
    %23 = arith.mulf %21, %22 : vector<8x32xf32>
    %24 = vector.broadcast %3 : vector<1x32xf32> to vector<8x32xf32>
    %25 = arith.addf %23, %24 : vector<8x32xf32>
    %c0_10 = arith.constant 0 : index
    %c0_11 = arith.constant 0 : index
    %c0_12 = arith.constant 0 : index
    %26 = vector.load %arg2[%c0_10, %c0_11, %c0_12] : memref<1x1x8xf32, #tpu.memory_space<vmem>>, vector<1x1x8xf32>
    %27 = vector.shape_cast %26 : vector<1x1x8xf32> to vector<1x8xf32>
    %28 = arith.truncf %25 : vector<8x32xf32> to vector<8x32xbf16>
    %c0_13 = arith.constant 0 : index
    %c0_14 = arith.constant 0 : index
    %c0_15 = arith.constant 0 : index
    %29 = vector.load %arg5[%c0_13, %c0_14, %c0_15] : memref<2x32x96xbf16, #tpu.memory_space<vmem>>, vector<1x32x96xbf16>
    %30 = vector.shape_cast %29 : vector<1x32x96xbf16> to vector<32x96xbf16>
    %cst_16 = arith.constant dense<0.000000e+00> : vector<8x96xf32>
    %31 = tpu.matmul %28, %30, %cst_16 {dimension_numbers = #tpu.dot_dimension_numbers<[1], [0], [0], [1], [0, 0, 1, 1], [], []>} : vector<8x32xbf16>, vector<32x96xbf16>, vector<8x96xf32> -> vector<8x96xf32>
    %c0_17 = arith.constant 0 : index
    %c0_18 = arith.constant 0 : index
    %c0_19 = arith.constant 0 : index
    %32 = vector.load %arg6[%c0_17, %c0_18, %c0_19] : memref<2x1x96xf32, #tpu.memory_space<vmem>>, vector<1x1x96xf32>
    %33 = vector.shape_cast %32 : vector<1x1x96xf32> to vector<1x96xf32>
    %34 = vector.broadcast %33 : vector<1x96xf32> to vector<8x96xf32>
    %35 = arith.addf %31, %34 : vector<8x96xf32>
    %36 = vector.extract_strided_slice %35 {offsets = [0, 0], sizes = [8, 16], strides = [1, 1]} : vector<8x96xf32> to vector<8x16xf32>
    %37 = arith.truncf %36 : vector<8x16xf32> to vector<8x16xbf16>
    %38 = vector.extract_strided_slice %35 {offsets = [0, 32], sizes = [8, 16], strides = [1, 1]} : vector<8x96xf32> to vector<8x16xf32>
    %39 = arith.truncf %38 : vector<8x16xf32> to vector<8x16xbf16>
    %40 = vector.extract_strided_slice %35 {offsets = [0, 64], sizes = [8, 16], strides = [1, 1]} : vector<8x96xf32> to vector<8x16xf32>
    %41 = arith.truncf %40 : vector<8x16xf32> to vector<8x16xbf16>
    %cst_20 = arith.constant dense<0.000000e+00> : vector<8x8xf32>
    %42 = tpu.matmul %37, %39, %cst_20 {dimension_numbers = #tpu.dot_dimension_numbers<[1], [1], [0], [0], [0, 0, 1, 0], [], []>} : vector<8x16xbf16>, vector<8x16xbf16>, vector<8x8xf32> -> vector<8x8xf32>
    %cst_21 = arith.constant 2.500000e-01 : f32
    %43 = vector.broadcast %cst_21 : f32 to vector<8x8xf32>
    %44 = arith.mulf %42, %43 : vector<8x8xf32>
    %45 = vector.broadcast %27 : vector<1x8xf32> to vector<8x8xf32>
    %46 = arith.addf %44, %45 : vector<8x8xf32>
    %cst_22 = arith.constant dense<0xFF800000> : vector<8xf32>
    %47 = vector.multi_reduction <maximumf>, %46, %cst_22 [1] : vector<8x8xf32> to vector<8xf32>
    %48 = vector.shape_cast %47 : vector<8xf32> to vector<8x1xf32>
    %49 = vector.broadcast %48 : vector<8x1xf32> to vector<8x8xf32>
    %50 = arith.subf %46, %49 : vector<8x8xf32>
    %51 = math.exp %50 : vector<8x8xf32>
    %cst_23 = arith.constant dense<0.000000e+00> : vector<8xf32>
    %52 = vector.multi_reduction <add>, %51, %cst_23 [1] : vector<8x8xf32> to vector<8xf32>
    %53 = vector.shape_cast %52 : vector<8xf32> to vector<8x1xf32>
    %54 = tpu.reciprocal %53 : vector<8x1xf32> -> vector<8x1xf32>
    %55 = vector.broadcast %54 : vector<8x1xf32> to vector<8x8xf32>
    %56 = arith.mulf %51, %55 : vector<8x8xf32>
    %57 = arith.truncf %56 : vector<8x8xf32> to vector<8x8xbf16>
    %cst_24 = arith.constant dense<0.000000e+00> : vector<8x16xf32>
    %58 = tpu.matmul %57, %41, %cst_24 {dimension_numbers = #tpu.dot_dimension_numbers<[1], [0], [0], [1], [0, 0, 1, 1], [], []>} : vector<8x8xbf16>, vector<8x16xbf16>, vector<8x16xf32> -> vector<8x16xf32>
    %c0_25 = arith.constant 0 : index
    %c0_26 = arith.constant 0 : index
    %59 = vector.load %arg22[%c0_25, %c0_26] : memref<8x32xf32, #tpu.memory_space<vmem>>, vector<8x16xf32>
    tpu.vector_store %arg22[%c0_25, %c0_26], %58 {strides = array<i32>} : memref<8x32xf32, #tpu.memory_space<vmem>>, vector<8x16xf32>,
    %60 = vector.extract_strided_slice %35 {offsets = [0, 16], sizes = [8, 16], strides = [1, 1]} : vector<8x96xf32> to vector<8x16xf32>
    %61 = arith.truncf %60 : vector<8x16xf32> to vector<8x16xbf16>
    %62 = vector.extract_strided_slice %35 {offsets = [0, 48], sizes = [8, 16], strides = [1, 1]} : vector<8x96xf32> to vector<8x16xf32>
    %63 = arith.truncf %62 : vector<8x16xf32> to vector<8x16xbf16>
    %64 = vector.extract_strided_slice %35 {offsets = [0, 80], sizes = [8, 16], strides = [1, 1]} : vector<8x96xf32> to vector<8x16xf32>
    %65 = arith.truncf %64 : vector<8x16xf32> to vector<8x16xbf16>
    %cst_27 = arith.constant dense<0.000000e+00> : vector<8x8xf32>
    %66 = tpu.matmul %61, %63, %cst_27 {dimension_numbers = #tpu.dot_dimension_numbers<[1], [1], [0], [0], [0, 0, 1, 0], [], []>} : vector<8x16xbf16>, vector<8x16xbf16>, vector<8x8xf32> -> vector<8x8xf32>
    %cst_28 = arith.constant 2.500000e-01 : f32
    %67 = vector.broadcast %cst_28 : f32 to vector<8x8xf32>
    %68 = arith.mulf %66, %67 : vector<8x8xf32>
    %69 = vector.broadcast %27 : vector<1x8xf32> to vector<8x8xf32>
    %70 = arith.addf %68, %69 : vector<8x8xf32>
    %cst_29 = arith.constant dense<0xFF800000> : vector<8xf32>
    %71 = vector.multi_reduction <maximumf>, %70, %cst_29 [1] : vector<8x8xf32> to vector<8xf32>
    %72 = vector.shape_cast %71 : vector<8xf32> to vector<8x1xf32>
    %73 = vector.broadcast %72 : vector<8x1xf32> to vector<8x8xf32>
    %74 = arith.subf %70, %73 : vector<8x8xf32>
    %75 = math.exp %74 : vector<8x8xf32>
    %cst_30 = arith.constant dense<0.000000e+00> : vector<8xf32>
    %76 = vector.multi_reduction <add>, %75, %cst_30 [1] : vector<8x8xf32> to vector<8xf32>
    %77 = vector.shape_cast %76 : vector<8xf32> to vector<8x1xf32>
    %78 = tpu.reciprocal %77 : vector<8x1xf32> -> vector<8x1xf32>
    %79 = vector.broadcast %78 : vector<8x1xf32> to vector<8x8xf32>
    %80 = arith.mulf %75, %79 : vector<8x8xf32>
    %81 = arith.truncf %80 : vector<8x8xf32> to vector<8x8xbf16>
    %cst_31 = arith.constant dense<0.000000e+00> : vector<8x16xf32>
    %82 = tpu.matmul %81, %65, %cst_31 {dimension_numbers = #tpu.dot_dimension_numbers<[1], [0], [0], [1], [0, 0, 1, 1], [], []>} : vector<8x8xbf16>, vector<8x16xbf16>, vector<8x16xf32> -> vector<8x16xf32>
    %c0_32 = arith.constant 0 : index
    %c16 = arith.constant 16 : index
    %83 = vector.load %arg22[%c0_32, %c16] : memref<8x32xf32, #tpu.memory_space<vmem>>, vector<8x16xf32>
    tpu.vector_store %arg22[%c0_32, %c16], %82 {strides = array<i32>} : memref<8x32xf32, #tpu.memory_space<vmem>>, vector<8x16xf32>,
    %c0_33 = arith.constant 0 : index
    %c0_34 = arith.constant 0 : index
    %84 = vector.load %arg22[%c0_33, %c0_34] : memref<8x32xf32, #tpu.memory_space<vmem>>, vector<8x32xf32>
    %85 = arith.truncf %84 : vector<8x32xf32> to vector<8x32xbf16>
    %c0_35 = arith.constant 0 : index
    %c0_36 = arith.constant 0 : index
    %c0_37 = arith.constant 0 : index
    %86 = vector.load %arg7[%c0_35, %c0_36, %c0_37] : memref<2x32x32xbf16, #tpu.memory_space<vmem>>, vector<1x32x32xbf16>
    %87 = vector.shape_cast %86 : vector<1x32x32xbf16> to vector<32x32xbf16>
    %cst_38 = arith.constant dense<0.000000e+00> : vector<8x32xf32>
    %88 = tpu.matmul %85, %87, %cst_38 {dimension_numbers = #tpu.dot_dimension_numbers<[1], [0], [0], [1], [0, 0, 1, 1], [], []>} : vector<8x32xbf16>, vector<32x32xbf16>, vector<8x32xf32> -> vector<8x32xf32>
    %c0_39 = arith.constant 0 : index
    %c0_40 = arith.constant 0 : index
    %c0_41 = arith.constant 0 : index
    %89 = vector.load %arg8[%c0_39, %c0_40, %c0_41] : memref<2x1x32xf32, #tpu.memory_space<vmem>>, vector<1x1x32xf32>
    %90 = vector.shape_cast %89 : vector<1x1x32xf32> to vector<1x32xf32>
    %91 = vector.broadcast %90 : vector<1x32xf32> to vector<8x32xf32>
    %92 = arith.addf %88, %91 : vector<8x32xf32>
    %93 = arith.addf %25, %92 : vector<8x32xf32>
    %c0_42 = arith.constant 0 : index
    %c0_43 = arith.constant 0 : index
    %c0_44 = arith.constant 0 : index
    %94 = vector.load %arg9[%c0_42, %c0_43, %c0_44] : memref<2x1x32xf32, #tpu.memory_space<vmem>>, vector<1x1x32xf32>
    %95 = vector.shape_cast %94 : vector<1x1x32xf32> to vector<1x32xf32>
    %c0_45 = arith.constant 0 : index
    %c0_46 = arith.constant 0 : index
    %c0_47 = arith.constant 0 : index
    %96 = vector.load %arg10[%c0_45, %c0_46, %c0_47] : memref<2x1x32xf32, #tpu.memory_space<vmem>>, vector<1x1x32xf32>
    %97 = vector.shape_cast %96 : vector<1x1x32xf32> to vector<1x32xf32>
    %cst_48 = arith.constant dense<0.000000e+00> : vector<8xf32>
    %98 = vector.multi_reduction <add>, %93, %cst_48 [1] : vector<8x32xf32> to vector<8xf32>
    %99 = vector.shape_cast %98 : vector<8xf32> to vector<8x1xf32>
    %cst_49 = arith.constant 3.200000e+01 : f32
    %100 = vector.broadcast %cst_49 : f32 to vector<8x1xf32>
    %101 = arith.divf %99, %100 : vector<8x1xf32>
    %102 = vector.broadcast %101 : vector<8x1xf32> to vector<8x32xf32>
    %103 = arith.subf %93, %102 : vector<8x32xf32>
    %104 = arith.mulf %103, %103 : vector<8x32xf32>
    %cst_50 = arith.constant dense<0.000000e+00> : vector<8xf32>
    %105 = vector.multi_reduction <add>, %104, %cst_50 [1] : vector<8x32xf32> to vector<8xf32>
    %106 = vector.shape_cast %105 : vector<8xf32> to vector<8x1xf32>
    %cst_51 = arith.constant 3.200000e+01 : f32
    %107 = vector.broadcast %cst_51 : f32 to vector<8x1xf32>
    %108 = arith.divf %106, %107 : vector<8x1xf32>
    %109 = vector.broadcast %101 : vector<8x1xf32> to vector<8x32xf32>
    %110 = arith.subf %93, %109 : vector<8x32xf32>
    %cst_52 = arith.constant 9.99999996E-13 : f32
    %111 = vector.broadcast %cst_52 : f32 to vector<8x1xf32>
    %112 = arith.addf %108, %111 : vector<8x1xf32>
    %113 = math.rsqrt %112 : vector<8x1xf32>
    %114 = vector.broadcast %113 : vector<8x1xf32> to vector<8x32xf32>
    %115 = arith.mulf %110, %114 : vector<8x32xf32>
    %116 = vector.broadcast %95 : vector<1x32xf32> to vector<8x32xf32>
    %117 = arith.mulf %115, %116 : vector<8x32xf32>
    %118 = vector.broadcast %97 : vector<1x32xf32> to vector<8x32xf32>
    %119 = arith.addf %117, %118 : vector<8x32xf32>
    %120 = arith.truncf %119 : vector<8x32xf32> to vector<8x32xbf16>
    %c0_53 = arith.constant 0 : index
    %c0_54 = arith.constant 0 : index
    %c0_55 = arith.constant 0 : index
    %121 = vector.load %arg11[%c0_53, %c0_54, %c0_55] : memref<2x32x64xbf16, #tpu.memory_space<vmem>>, vector<1x32x64xbf16>
    %122 = vector.shape_cast %121 : vector<1x32x64xbf16> to vector<32x64xbf16>
    %cst_56 = arith.constant dense<0.000000e+00> : vector<8x64xf32>
    %123 = tpu.matmul %120, %122, %cst_56 {dimension_numbers = #tpu.dot_dimension_numbers<[1], [0], [0], [1], [0, 0, 1, 1], [], []>} : vector<8x32xbf16>, vector<32x64xbf16>, vector<8x64xf32> -> vector<8x64xf32>
    %c0_57 = arith.constant 0 : index
    %c0_58 = arith.constant 0 : index
    %c0_59 = arith.constant 0 : index
    %124 = vector.load %arg12[%c0_57, %c0_58, %c0_59] : memref<2x1x64xf32, #tpu.memory_space<vmem>>, vector<1x1x64xf32>
    %125 = vector.shape_cast %124 : vector<1x1x64xf32> to vector<1x64xf32>
    %126 = vector.broadcast %125 : vector<1x64xf32> to vector<8x64xf32>
    %127 = arith.addf %123, %126 : vector<8x64xf32>
    %cst_60 = arith.constant 5.000000e-01 : f32
    %128 = vector.broadcast %cst_60 : f32 to vector<8x64xf32>
    %129 = arith.mulf %128, %127 : vector<8x64xf32>
    %cst_61 = arith.constant 4.471500e-02 : f32
    %130 = vector.broadcast %cst_61 : f32 to vector<8x64xf32>
    %131 = arith.mulf %130, %127 : vector<8x64xf32>
    %132 = arith.mulf %131, %127 : vector<8x64xf32>
    %133 = arith.mulf %132, %127 : vector<8x64xf32>
    %134 = arith.addf %127, %133 : vector<8x64xf32>
    %cst_62 = arith.constant 0.797884583 : f32
    %135 = vector.broadcast %cst_62 : f32 to vector<8x64xf32>
    %136 = arith.mulf %135, %134 : vector<8x64xf32>
    %137 = math.tanh %136 : vector<8x64xf32>
    %cst_63 = arith.constant 1.000000e+00 : f32
    %138 = vector.broadcast %cst_63 : f32 to vector<8x64xf32>
    %139 = arith.addf %138, %137 : vector<8x64xf32>
    %140 = arith.mulf %129, %139 : vector<8x64xf32>
    %141 = arith.truncf %140 : vector<8x64xf32> to vector<8x64xbf16>
    %c0_64 = arith.constant 0 : index
    %c0_65 = arith.constant 0 : index
    %c0_66 = arith.constant 0 : index
    %142 = vector.load %arg13[%c0_64, %c0_65, %c0_66] : memref<2x64x32xbf16, #tpu.memory_space<vmem>>, vector<1x64x32xbf16>
    %143 = vector.shape_cast %142 : vector<1x64x32xbf16> to vector<64x32xbf16>
    %cst_67 = arith.constant dense<0.000000e+00> : vector<8x32xf32>
    %144 = tpu.matmul %141, %143, %cst_67 {dimension_numbers = #tpu.dot_dimension_numbers<[1], [0], [0], [1], [0, 0, 1, 1], [], []>} : vector<8x64xbf16>, vector<64x32xbf16>, vector<8x32xf32> -> vector<8x32xf32>
    %c0_68 = arith.constant 0 : index
    %c0_69 = arith.constant 0 : index
    %c0_70 = arith.constant 0 : index
    %145 = vector.load %arg14[%c0_68, %c0_69, %c0_70] : memref<2x1x32xf32, #tpu.memory_space<vmem>>, vector<1x1x32xf32>
    %146 = vector.shape_cast %145 : vector<1x1x32xf32> to vector<1x32xf32>
    %147 = vector.broadcast %146 : vector<1x32xf32> to vector<8x32xf32>
    %148 = arith.addf %144, %147 : vector<8x32xf32>
    %149 = arith.addf %119, %148 : vector<8x32xf32>
    %c0_71 = arith.constant 0 : index
    %c0_72 = arith.constant 0 : index
    %c0_73 = arith.constant 0 : index
    %150 = vector.load %arg15[%c0_71, %c0_72, %c0_73] : memref<2x1x32xf32, #tpu.memory_space<vmem>>, vector<1x1x32xf32>
    %151 = vector.shape_cast %150 : vector<1x1x32xf32> to vector<1x32xf32>
    %c0_74 = arith.constant 0 : index
    %c0_75 = arith.constant 0 : index
    %c0_76 = arith.constant 0 : index
    %152 = vector.load %arg16[%c0_74, %c0_75, %c0_76] : memref<2x1x32xf32, #tpu.memory_space<vmem>>, vector<1x1x32xf32>
    %153 = vector.shape_cast %152 : vector<1x1x32xf32> to vector<1x32xf32>
    %cst_77 = arith.constant dense<0.000000e+00> : vector<8xf32>
    %154 = vector.multi_reduction <add>, %149, %cst_77 [1] : vector<8x32xf32> to vector<8xf32>
    %155 = vector.shape_cast %154 : vector<8xf32> to vector<8x1xf32>
    %cst_78 = arith.constant 3.200000e+01 : f32
    %156 = vector.broadcast %cst_78 : f32 to vector<8x1xf32>
    %157 = arith.divf %155, %156 : vector<8x1xf32>
    %158 = vector.broadcast %157 : vector<8x1xf32> to vector<8x32xf32>
    %159 = arith.subf %149, %158 : vector<8x32xf32>
    %160 = arith.mulf %159, %159 : vector<8x32xf32>
    %cst_79 = arith.constant dense<0.000000e+00> : vector<8xf32>
    %161 = vector.multi_reduction <add>, %160, %cst_79 [1] : vector<8x32xf32> to vector<8xf32>
    %162 = vector.shape_cast %161 : vector<8xf32> to vector<8x1xf32>
    %cst_80 = arith.constant 3.200000e+01 : f32
    %163 = vector.broadcast %cst_80 : f32 to vector<8x1xf32>
    %164 = arith.divf %162, %163 : vector<8x1xf32>
    %165 = vector.broadcast %157 : vector<8x1xf32> to vector<8x32xf32>
    %166 = arith.subf %149, %165 : vector<8x32xf32>
    %cst_81 = arith.constant 9.99999996E-13 : f32
    %167 = vector.broadcast %cst_81 : f32 to vector<8x1xf32>
    %168 = arith.addf %164, %167 : vector<8x1xf32>
    %169 = math.rsqrt %168 : vector<8x1xf32>
    %170 = vector.broadcast %169 : vector<8x1xf32> to vector<8x32xf32>
    %171 = arith.mulf %166, %170 : vector<8x32xf32>
    %172 = vector.broadcast %151 : vector<1x32xf32> to vector<8x32xf32>
    %173 = arith.mulf %171, %172 : vector<8x32xf32>
    %174 = vector.broadcast %153 : vector<1x32xf32> to vector<8x32xf32>
    %175 = arith.addf %173, %174 : vector<8x32xf32>
    %176 = arith.truncf %175 : vector<8x32xf32> to vector<8x32xbf16>
    %c1 = arith.constant 1 : index
    %c0_82 = arith.constant 0 : index
    %c0_83 = arith.constant 0 : index
    %177 = vector.load %arg5[%c1, %c0_82, %c0_83] : memref<2x32x96xbf16, #tpu.memory_space<vmem>>, vector<1x32x96xbf16>
    %178 = vector.shape_cast %177 : vector<1x32x96xbf16> to vector<32x96xbf16>
    %cst_84 = arith.constant dense<0.000000e+00> : vector<8x96xf32>
    %179 = tpu.matmul %176, %178, %cst_84 {dimension_numbers = #tpu.dot_dimension_numbers<[1], [0], [0], [1], [0, 0, 1, 1], [], []>} : vector<8x32xbf16>, vector<32x96xbf16>, vector<8x96xf32> -> vector<8x96xf32>
    %c1_85 = arith.constant 1 : index
    %c0_86 = arith.constant 0 : index
    %c0_87 = arith.constant 0 : index
    %180 = vector.load %arg6[%c1_85, %c0_86, %c0_87] : memref<2x1x96xf32, #tpu.memory_space<vmem>>, vector<1x1x96xf32>
    %181 = vector.shape_cast %180 : vector<1x1x96xf32> to vector<1x96xf32>
    %182 = vector.broadcast %181 : vector<1x96xf32> to vector<8x96xf32>
    %183 = arith.addf %179, %182 : vector<8x96xf32>
    %184 = vector.extract_strided_slice %183 {offsets = [0, 0], sizes = [8, 16], strides = [1, 1]} : vector<8x96xf32> to vector<8x16xf32>
    %185 = arith.truncf %184 : vector<8x16xf32> to vector<8x16xbf16>
    %186 = vector.extract_strided_slice %183 {offsets = [0, 32], sizes = [8, 16], strides = [1, 1]} : vector<8x96xf32> to vector<8x16xf32>
    %187 = arith.truncf %186 : vector<8x16xf32> to vector<8x16xbf16>
    %188 = vector.extract_strided_slice %183 {offsets = [0, 64], sizes = [8, 16], strides = [1, 1]} : vector<8x96xf32> to vector<8x16xf32>
    %189 = arith.truncf %188 : vector<8x16xf32> to vector<8x16xbf16>
    %cst_88 = arith.constant dense<0.000000e+00> : vector<8x8xf32>
    %190 = tpu.matmul %185, %187, %cst_88 {dimension_numbers = #tpu.dot_dimension_numbers<[1], [1], [0], [0], [0, 0, 1, 0], [], []>} : vector<8x16xbf16>, vector<8x16xbf16>, vector<8x8xf32> -> vector<8x8xf32>
    %cst_89 = arith.constant 2.500000e-01 : f32
    %191 = vector.broadcast %cst_89 : f32 to vector<8x8xf32>
    %192 = arith.mulf %190, %191 : vector<8x8xf32>
    %193 = vector.broadcast %27 : vector<1x8xf32> to vector<8x8xf32>
    %194 = arith.addf %192, %193 : vector<8x8xf32>
    %cst_90 = arith.constant dense<0xFF800000> : vector<8xf32>
    %195 = vector.multi_reduction <maximumf>, %194, %cst_90 [1] : vector<8x8xf32> to vector<8xf32>
    %196 = vector.shape_cast %195 : vector<8xf32> to vector<8x1xf32>
    %197 = vector.broadcast %196 : vector<8x1xf32> to vector<8x8xf32>
    %198 = arith.subf %194, %197 : vector<8x8xf32>
    %199 = math.exp %198 : vector<8x8xf32>
    %cst_91 = arith.constant dense<0.000000e+00> : vector<8xf32>
    %200 = vector.multi_reduction <add>, %199, %cst_91 [1] : vector<8x8xf32> to vector<8xf32>
    %201 = vector.shape_cast %200 : vector<8xf32> to vector<8x1xf32>
    %202 = tpu.reciprocal %201 : vector<8x1xf32> -> vector<8x1xf32>
    %203 = vector.broadcast %202 : vector<8x1xf32> to vector<8x8xf32>
    %204 = arith.mulf %199, %203 : vector<8x8xf32>
    %205 = arith.truncf %204 : vector<8x8xf32> to vector<8x8xbf16>
    %cst_92 = arith.constant dense<0.000000e+00> : vector<8x16xf32>
    %206 = tpu.matmul %205, %189, %cst_92 {dimension_numbers = #tpu.dot_dimension_numbers<[1], [0], [0], [1], [0, 0, 1, 1], [], []>} : vector<8x8xbf16>, vector<8x16xbf16>, vector<8x16xf32> -> vector<8x16xf32>
    %c0_93 = arith.constant 0 : index
    %c0_94 = arith.constant 0 : index
    %207 = vector.load %arg22[%c0_93, %c0_94] : memref<8x32xf32, #tpu.memory_space<vmem>>, vector<8x16xf32>
    tpu.vector_store %arg22[%c0_93, %c0_94], %206 {strides = array<i32>} : memref<8x32xf32, #tpu.memory_space<vmem>>, vector<8x16xf32>,
    %208 = vector.extract_strided_slice %183 {offsets = [0, 16], sizes = [8, 16], strides = [1, 1]} : vector<8x96xf32> to vector<8x16xf32>
    %209 = arith.truncf %208 : vector<8x16xf32> to vector<8x16xbf16>
    %210 = vector.extract_strided_slice %183 {offsets = [0, 48], sizes = [8, 16], strides = [1, 1]} : vector<8x96xf32> to vector<8x16xf32>
    %211 = arith.truncf %210 : vector<8x16xf32> to vector<8x16xbf16>
    %212 = vector.extract_strided_slice %183 {offsets = [0, 80], sizes = [8, 16], strides = [1, 1]} : vector<8x96xf32> to vector<8x16xf32>
    %213 = arith.truncf %212 : vector<8x16xf32> to vector<8x16xbf16>
    %cst_95 = arith.constant dense<0.000000e+00> : vector<8x8xf32>
    %214 = tpu.matmul %209, %211, %cst_95 {dimension_numbers = #tpu.dot_dimension_numbers<[1], [1], [0], [0], [0, 0, 1, 0], [], []>} : vector<8x16xbf16>, vector<8x16xbf16>, vector<8x8xf32> -> vector<8x8xf32>
    %cst_96 = arith.constant 2.500000e-01 : f32
    %215 = vector.broadcast %cst_96 : f32 to vector<8x8xf32>
    %216 = arith.mulf %214, %215 : vector<8x8xf32>
    %217 = vector.broadcast %27 : vector<1x8xf32> to vector<8x8xf32>
    %218 = arith.addf %216, %217 : vector<8x8xf32>
    %cst_97 = arith.constant dense<0xFF800000> : vector<8xf32>
    %219 = vector.multi_reduction <maximumf>, %218, %cst_97 [1] : vector<8x8xf32> to vector<8xf32>
    %220 = vector.shape_cast %219 : vector<8xf32> to vector<8x1xf32>
    %221 = vector.broadcast %220 : vector<8x1xf32> to vector<8x8xf32>
    %222 = arith.subf %218, %221 : vector<8x8xf32>
    %223 = math.exp %222 : vector<8x8xf32>
    %cst_98 = arith.constant dense<0.000000e+00> : vector<8xf32>
    %224 = vector.multi_reduction <add>, %223, %cst_98 [1] : vector<8x8xf32> to vector<8xf32>
    %225 = vector.shape_cast %224 : vector<8xf32> to vector<8x1xf32>
    %226 = tpu.reciprocal %225 : vector<8x1xf32> -> vector<8x1xf32>
    %227 = vector.broadcast %226 : vector<8x1xf32> to vector<8x8xf32>
    %228 = arith.mulf %223, %227 : vector<8x8xf32>
    %229 = arith.truncf %228 : vector<8x8xf32> to vector<8x8xbf16>
    %cst_99 = arith.constant dense<0.000000e+00> : vector<8x16xf32>
    %230 = tpu.matmul %229, %213, %cst_99 {dimension_numbers = #tpu.dot_dimension_numbers<[1], [0], [0], [1], [0, 0, 1, 1], [], []>} : vector<8x8xbf16>, vector<8x16xbf16>, vector<8x16xf32> -> vector<8x16xf32>
    %c0_100 = arith.constant 0 : index
    %c16_101 = arith.constant 16 : index
    %231 = vector.load %arg22[%c0_100, %c16_101] : memref<8x32xf32, #tpu.memory_space<vmem>>, vector<8x16xf32>
    tpu.vector_store %arg22[%c0_100, %c16_101], %230 {strides = array<i32>} : memref<8x32xf32, #tpu.memory_space<vmem>>, vector<8x16xf32>,
    %c0_102 = arith.constant 0 : index
    %c0_103 = arith.constant 0 : index
    %232 = vector.load %arg22[%c0_102, %c0_103] : memref<8x32xf32, #tpu.memory_space<vmem>>, vector<8x32xf32>
    %233 = arith.truncf %232 : vector<8x32xf32> to vector<8x32xbf16>
    %c1_104 = arith.constant 1 : index
    %c0_105 = arith.constant 0 : index
    %c0_106 = arith.constant 0 : index
    %234 = vector.load %arg7[%c1_104, %c0_105, %c0_106] : memref<2x32x32xbf16, #tpu.memory_space<vmem>>, vector<1x32x32xbf16>
    %235 = vector.shape_cast %234 : vector<1x32x32xbf16> to vector<32x32xbf16>
    %cst_107 = arith.constant dense<0.000000e+00> : vector<8x32xf32>
    %236 = tpu.matmul %233, %235, %cst_107 {dimension_numbers = #tpu.dot_dimension_numbers<[1], [0], [0], [1], [0, 0, 1, 1], [], []>} : vector<8x32xbf16>, vector<32x32xbf16>, vector<8x32xf32> -> vector<8x32xf32>
    %c1_108 = arith.constant 1 : index
    %c0_109 = arith.constant 0 : index
    %c0_110 = arith.constant 0 : index
    %237 = vector.load %arg8[%c1_108, %c0_109, %c0_110] : memref<2x1x32xf32, #tpu.memory_space<vmem>>, vector<1x1x32xf32>
    %238 = vector.shape_cast %237 : vector<1x1x32xf32> to vector<1x32xf32>
    %239 = vector.broadcast %238 : vector<1x32xf32> to vector<8x32xf32>
    %240 = arith.addf %236, %239 : vector<8x32xf32>
    %241 = arith.addf %175, %240 : vector<8x32xf32>
    %c1_111 = arith.constant 1 : index
    %c0_112 = arith.constant 0 : index
    %c0_113 = arith.constant 0 : index
    %242 = vector.load %arg9[%c1_111, %c0_112, %c0_113] : memref<2x1x32xf32, #tpu.memory_space<vmem>>, vector<1x1x32xf32>
    %243 = vector.shape_cast %242 : vector<1x1x32xf32> to vector<1x32xf32>
    %c1_114 = arith.constant 1 : index
    %c0_115 = arith.constant 0 : index
    %c0_116 = arith.constant 0 : index
    %244 = vector.load %arg10[%c1_114, %c0_115, %c0_116] : memref<2x1x32xf32, #tpu.memory_space<vmem>>, vector<1x1x32xf32>
    %245 = vector.shape_cast %244 : vector<1x1x32xf32> to vector<1x32xf32>
    %cst_117 = arith.constant dense<0.000000e+00> : vector<8xf32>
    %246 = vector.multi_reduction <add>, %241, %cst_117 [1] : vector<8x32xf32> to vector<8xf32>
    %247 = vector.shape_cast %246 : vector<8xf32> to vector<8x1xf32>
    %cst_118 = arith.constant 3.200000e+01 : f32
    %248 = vector.broadcast %cst_118 : f32 to vector<8x1xf32>
    %249 = arith.divf %247, %248 : vector<8x1xf32>
    %250 = vector.broadcast %249 : vector<8x1xf32> to vector<8x32xf32>
    %251 = arith.subf %241, %250 : vector<8x32xf32>
    %252 = arith.mulf %251, %251 : vector<8x32xf32>
    %cst_119 = arith.constant dense<0.000000e+00> : vector<8xf32>
    %253 = vector.multi_reduction <add>, %252, %cst_119 [1] : vector<8x32xf32> to vector<8xf32>
    %254 = vector.shape_cast %253 : vector<8xf32> to vector<8x1xf32>
    %cst_120 = arith.constant 3.200000e+01 : f32
    %255 = vector.broadcast %cst_120 : f32 to vector<8x1xf32>
    %256 = arith.divf %254, %255 : vector<8x1xf32>
    %257 = vector.broadcast %249 : vector<8x1xf32> to vector<8x32xf32>
    %258 = arith.subf %241, %257 : vector<8x32xf32>
    %cst_121 = arith.constant 9.99999996E-13 : f32
    %259 = vector.broadcast %cst_121 : f32 to vector<8x1xf32>
    %260 = arith.addf %256, %259 : vector<8x1xf32>
    %261 = math.rsqrt %260 : vector<8x1xf32>
    %262 = vector.broadcast %261 : vector<8x1xf32> to vector<8x32xf32>
    %263 = arith.mulf %258, %262 : vector<8x32xf32>
    %264 = vector.broadcast %243 : vector<1x32xf32> to vector<8x32xf32>
    %265 = arith.mulf %263, %264 : vector<8x32xf32>
    %266 = vector.broadcast %245 : vector<1x32xf32> to vector<8x32xf32>
    %267 = arith.addf %265, %266 : vector<8x32xf32>
    %268 = arith.truncf %267 : vector<8x32xf32> to vector<8x32xbf16>
    %c1_122 = arith.constant 1 : index
    %c0_123 = arith.constant 0 : index
    %c0_124 = arith.constant 0 : index
    %269 = vector.load %arg11[%c1_122, %c0_123, %c0_124] : memref<2x32x64xbf16, #tpu.memory_space<vmem>>, vector<1x32x64xbf16>
    %270 = vector.shape_cast %269 : vector<1x32x64xbf16> to vector<32x64xbf16>
    %cst_125 = arith.constant dense<0.000000e+00> : vector<8x64xf32>
    %271 = tpu.matmul %268, %270, %cst_125 {dimension_numbers = #tpu.dot_dimension_numbers<[1], [0], [0], [1], [0, 0, 1, 1], [], []>} : vector<8x32xbf16>, vector<32x64xbf16>, vector<8x64xf32> -> vector<8x64xf32>
    %c1_126 = arith.constant 1 : index
    %c0_127 = arith.constant 0 : index
    %c0_128 = arith.constant 0 : index
    %272 = vector.load %arg12[%c1_126, %c0_127, %c0_128] : memref<2x1x64xf32, #tpu.memory_space<vmem>>, vector<1x1x64xf32>
    %273 = vector.shape_cast %272 : vector<1x1x64xf32> to vector<1x64xf32>
    %274 = vector.broadcast %273 : vector<1x64xf32> to vector<8x64xf32>
    %275 = arith.addf %271, %274 : vector<8x64xf32>
    %cst_129 = arith.constant 5.000000e-01 : f32
    %276 = vector.broadcast %cst_129 : f32 to vector<8x64xf32>
    %277 = arith.mulf %276, %275 : vector<8x64xf32>
    %cst_130 = arith.constant 4.471500e-02 : f32
    %278 = vector.broadcast %cst_130 : f32 to vector<8x64xf32>
    %279 = arith.mulf %278, %275 : vector<8x64xf32>
    %280 = arith.mulf %279, %275 : vector<8x64xf32>
    %281 = arith.mulf %280, %275 : vector<8x64xf32>
    %282 = arith.addf %275, %281 : vector<8x64xf32>
    %cst_131 = arith.constant 0.797884583 : f32
    %283 = vector.broadcast %cst_131 : f32 to vector<8x64xf32>
    %284 = arith.mulf %283, %282 : vector<8x64xf32>
    %285 = math.tanh %284 : vector<8x64xf32>
    %cst_132 = arith.constant 1.000000e+00 : f32
    %286 = vector.broadcast %cst_132 : f32 to vector<8x64xf32>
    %287 = arith.addf %286, %285 : vector<8x64xf32>
    %288 = arith.mulf %277, %287 : vector<8x64xf32>
    %289 = arith.truncf %288 : vector<8x64xf32> to vector<8x64xbf16>
    %c1_133 = arith.constant 1 : index
    %c0_134 = arith.constant 0 : index
    %c0_135 = arith.constant 0 : index
    %290 = vector.load %arg13[%c1_133, %c0_134, %c0_135] : memref<2x64x32xbf16, #tpu.memory_space<vmem>>, vector<1x64x32xbf16>
    %291 = vector.shape_cast %290 : vector<1x64x32xbf16> to vector<64x32xbf16>
    %cst_136 = arith.constant dense<0.000000e+00> : vector<8x32xf32>
    %292 = tpu.matmul %289, %291, %cst_136 {dimension_numbers = #tpu.dot_dimension_numbers<[1], [0], [0], [1], [0, 0, 1, 1], [], []>} : vector<8x64xbf16>, vector<64x32xbf16>, vector<8x32xf32> -> vector<8x32xf32>
    %c1_137 = arith.constant 1 : index
    %c0_138 = arith.constant 0 : index
    %c0_139 = arith.constant 0 : index
    %293 = vector.load %arg14[%c1_137, %c0_138, %c0_139] : memref<2x1x32xf32, #tpu.memory_space<vmem>>, vector<1x1x32xf32>
    %294 = vector.shape_cast %293 : vector<1x1x32xf32> to vector<1x32xf32>
    %295 = vector.broadcast %294 : vector<1x32xf32> to vector<8x32xf32>
    %296 = arith.addf %292, %295 : vector<8x32xf32>
    %297 = arith.addf %267, %296 : vector<8x32xf32>
    %c1_140 = arith.constant 1 : index
    %c0_141 = arith.constant 0 : index
    %c0_142 = arith.constant 0 : index
    %298 = vector.load %arg15[%c1_140, %c0_141, %c0_142] : memref<2x1x32xf32, #tpu.memory_space<vmem>>, vector<1x1x32xf32>
    %299 = vector.shape_cast %298 : vector<1x1x32xf32> to vector<1x32xf32>
    %c1_143 = arith.constant 1 : index
    %c0_144 = arith.constant 0 : index
    %c0_145 = arith.constant 0 : index
    %300 = vector.load %arg16[%c1_143, %c0_144, %c0_145] : memref<2x1x32xf32, #tpu.memory_space<vmem>>, vector<1x1x32xf32>
    %301 = vector.shape_cast %300 : vector<1x1x32xf32> to vector<1x32xf32>
    %cst_146 = arith.constant dense<0.000000e+00> : vector<8xf32>
    %302 = vector.multi_reduction <add>, %297, %cst_146 [1] : vector<8x32xf32> to vector<8xf32>
    %303 = vector.shape_cast %302 : vector<8xf32> to vector<8x1xf32>
    %cst_147 = arith.constant 3.200000e+01 : f32
    %304 = vector.broadcast %cst_147 : f32 to vector<8x1xf32>
    %305 = arith.divf %303, %304 : vector<8x1xf32>
    %306 = vector.broadcast %305 : vector<8x1xf32> to vector<8x32xf32>
    %307 = arith.subf %297, %306 : vector<8x32xf32>
    %308 = arith.mulf %307, %307 : vector<8x32xf32>
    %cst_148 = arith.constant dense<0.000000e+00> : vector<8xf32>
    %309 = vector.multi_reduction <add>, %308, %cst_148 [1] : vector<8x32xf32> to vector<8xf32>
    %310 = vector.shape_cast %309 : vector<8xf32> to vector<8x1xf32>
    %cst_149 = arith.constant 3.200000e+01 : f32
    %311 = vector.broadcast %cst_149 : f32 to vector<8x1xf32>
    %312 = arith.divf %310, %311 : vector<8x1xf32>
    %313 = vector.broadcast %305 : vector<8x1xf32> to vector<8x32xf32>
    %314 = arith.subf %297, %313 : vector<8x32xf32>
    %cst_150 = arith.constant 9.99999996E-13 : f32
    %315 = vector.broadcast %cst_150 : f32 to vector<8x1xf32>
    %316 = arith.addf %312, %315 : vector<8x1xf32>
    %317 = math.rsqrt %316 : vector<8x1xf32>
    %318 = vector.broadcast %317 : vector<8x1xf32> to vector<8x32xf32>
    %319 = arith.mulf %314, %318 : vector<8x32xf32>
    %320 = vector.broadcast %299 : vector<1x32xf32> to vector<8x32xf32>
    %321 = arith.mulf %319, %320 : vector<8x32xf32>
    %322 = vector.broadcast %301 : vector<1x32xf32> to vector<8x32xf32>
    %323 = arith.addf %321, %322 : vector<8x32xf32>
    %cst_151 = arith.constant dense<0.000000e+00> : vector<32xf32>
    %324 = vector.multi_reduction <add>, %323, %cst_151 [0] : vector<8x32xf32> to vector<32xf32>
    %325 = vector.shape_cast %324 : vector<32xf32> to vector<1x32xf32>
    %cst_152 = arith.constant 8.000000e+00 : f32
    %326 = vector.broadcast %cst_152 : f32 to vector<1x32xf32>
    %327 = arith.divf %325, %326 : vector<1x32xf32>
    %328 = arith.truncf %327 : vector<1x32xf32> to vector<1x32xbf16>
    %c0_153 = arith.constant 0 : index
    %c0_154 = arith.constant 0 : index
    %329 = vector.load %arg17[%c0_153, %c0_154] : memref<32x128xbf16, #tpu.memory_space<vmem>>, vector<32x128xbf16>
    %cst_155 = arith.constant dense<0.000000e+00> : vector<1x128xf32>
    %330 = tpu.matmul %328, %329, %cst_155 {dimension_numbers = #tpu.dot_dimension_numbers<[1], [0], [0], [1], [0, 0, 1, 1], [], []>} : vector<1x32xbf16>, vector<32x128xbf16>, vector<1x128xf32> -> vector<1x128xf32>
    %c0_156 = arith.constant 0 : index
    %c0_157 = arith.constant 0 : index
    %331 = vector.load %arg18[%c0_156, %c0_157] : memref<1x128xf32, #tpu.memory_space<vmem>>, vector<1x128xf32>
    %332 = arith.addf %330, %331 : vector<1x128xf32>
    %cst_158 = arith.constant 0.000000e+00 : f32
    %333 = vector.broadcast %cst_158 : f32 to vector<1x128xf32>
    %334 = arith.maximumf %332, %333 : vector<1x128xf32>
    %335 = arith.truncf %334 : vector<1x128xf32> to vector<1x128xbf16>
    %c0_159 = arith.constant 0 : index
    %c0_160 = arith.constant 0 : index
    %336 = vector.load %arg19[%c0_159, %c0_160] : memref<128x24xbf16, #tpu.memory_space<vmem>>, vector<128x24xbf16>
    %cst_161 = arith.constant dense<0.000000e+00> : vector<1x24xf32>
    %337 = tpu.matmul %335, %336, %cst_161 {dimension_numbers = #tpu.dot_dimension_numbers<[1], [0], [0], [1], [0, 0, 1, 1], [], []>} : vector<1x128xbf16>, vector<128x24xbf16>, vector<1x24xf32> -> vector<1x24xf32>
    %c0_162 = arith.constant 0 : index
    %c0_163 = arith.constant 0 : index
    %338 = vector.load %arg20[%c0_162, %c0_163] : memref<1x24xf32, #tpu.memory_space<vmem>>, vector<1x24xf32>
    %339 = arith.addf %337, %338 : vector<1x24xf32>
    %c0_164 = arith.constant 0 : index
    %c0_165 = arith.constant 0 : index
    %c0_166 = arith.constant 0 : index
    %340 = vector.load %arg21[%c0_164, %c0_165, %c0_166] : memref<1x1x24xf32, #tpu.memory_space<vmem>>, vector<1x1x24xf32>
    %341 = vector.shape_cast %340 : vector<1x1x24xf32> to vector<1x24xf32>
    %342 = vector.shape_cast %339 : vector<1x24xf32> to vector<1x1x24xf32>
    tpu.vector_store %arg21[%c0_164, %c0_165, %c0_166], %342 {strides = array<i32>} : memref<1x1x24xf32, #tpu.memory_space<vmem>>, vector<1x1x24xf32>,
    return
  }
  func.func @transform_0(%arg0: i32) -> (i32, i32, i32) {
    %c0_i32 = arith.constant 0 : i32
    %c0_i32_0 = arith.constant 0 : i32
    %c0_i32_1 = arith.constant 0 : i32
    return %arg0, %c0_i32, %c0_i32_0 : i32, i32, i32
  }
  func.func @transform_1(%arg0: i32) -> (i32, i32, i32) {
    %c0_i32 = arith.constant 0 : i32
    %c0_i32_0 = arith.constant 0 : i32
    %c0_i32_1 = arith.constant 0 : i32
    return %arg0, %c0_i32, %c0_i32_0 : i32, i32, i32
  }
  func.func @transform_2(%arg0: i32) -> (i32, i32) {
    %c0_i32 = arith.constant 0 : i32
    %c0_i32_0 = arith.constant 0 : i32
    %c0_i32_1 = arith.constant 0 : i32
    return %c0_i32, %c0_i32_0 : i32, i32
  }
  func.func @transform_3(%arg0: i32) -> (i32, i32) {
    %c0_i32 = arith.constant 0 : i32
    %c0_i32_0 = arith.constant 0 : i32
    %c0_i32_1 = arith.constant 0 : i32
    return %c0_i32, %c0_i32_0 : i32, i32
  }
  func.func @transform_4(%arg0: i32) -> (i32, i32, i32) {
    %c0_i32 = arith.constant 0 : i32
    %c0_i32_0 = arith.constant 0 : i32
    %c0_i32_1 = arith.constant 0 : i32
    %c0_i32_2 = arith.constant 0 : i32
    return %c0_i32, %c0_i32_0, %c0_i32_1 : i32, i32, i32
  }
  func.func @transform_5(%arg0: i32) -> (i32, i32, i32) {
    %c0_i32 = arith.constant 0 : i32
    %c0_i32_0 = arith.constant 0 : i32
    %c0_i32_1 = arith.constant 0 : i32
    %c0_i32_2 = arith.constant 0 : i32
    return %c0_i32, %c0_i32_0, %c0_i32_1 : i32, i32, i32
  }
  func.func @transform_6(%arg0: i32) -> (i32, i32, i32) {
    %c0_i32 = arith.constant 0 : i32
    %c0_i32_0 = arith.constant 0 : i32
    %c0_i32_1 = arith.constant 0 : i32
    %c0_i32_2 = arith.constant 0 : i32
    return %c0_i32, %c0_i32_0, %c0_i32_1 : i32, i32, i32
  }
  func.func @transform_7(%arg0: i32) -> (i32, i32, i32) {
    %c0_i32 = arith.constant 0 : i32
    %c0_i32_0 = arith.constant 0 : i32
    %c0_i32_1 = arith.constant 0 : i32
    %c0_i32_2 = arith.constant 0 : i32
    return %c0_i32, %c0_i32_0, %c0_i32_1 : i32, i32, i32
  }
  func.func @transform_8(%arg0: i32) -> (i32, i32, i32) {
    %c0_i32 = arith.constant 0 : i32
    %c0_i32_0 = arith.constant 0 : i32
    %c0_i32_1 = arith.constant 0 : i32
    %c0_i32_2 = arith.constant 0 : i32
    return %c0_i32, %c0_i32_0, %c0_i32_1 : i32, i32, i32
  }
  func.func @transform_9(%arg0: i32) -> (i32, i32, i32) {
    %c0_i32 = arith.constant 0 : i32
    %c0_i32_0 = arith.constant 0 : i32
    %c0_i32_1 = arith.constant 0 : i32
    %c0_i32_2 = arith.constant 0 : i32
    return %c0_i32, %c0_i32_0, %c0_i32_1 : i32, i32, i32
  }
  func.func @transform_10(%arg0: i32) -> (i32, i32, i32) {
    %c0_i32 = arith.constant 0 : i32
    %c0_i32_0 = arith.constant 0 : i32
    %c0_i32_1 = arith.constant 0 : i32
    %c0_i32_2 = arith.constant 0 : i32
    return %c0_i32, %c0_i32_0, %c0_i32_1 : i32, i32, i32
  }
  func.func @transform_11(%arg0: i32) -> (i32, i32, i32) {
    %c0_i32 = arith.constant 0 : i32
    %c0_i32_0 = arith.constant 0 : i32
    %c0_i32_1 = arith.constant 0 : i32
    %c0_i32_2 = arith.constant 0 : i32
    return %c0_i32, %c0_i32_0, %c0_i32_1 : i32, i32, i32
  }
  func.func @transform_12(%arg0: i32) -> (i32, i32, i32) {
    %c0_i32 = arith.constant 0 : i32
    %c0_i32_0 = arith.constant 0 : i32
    %c0_i32_1 = arith.constant 0 : i32
    %c0_i32_2 = arith.constant 0 : i32
    return %c0_i32, %c0_i32_0, %c0_i32_1 : i32, i32, i32
  }
  func.func @transform_13(%arg0: i32) -> (i32, i32, i32) {
    %c0_i32 = arith.constant 0 : i32
    %c0_i32_0 = arith.constant 0 : i32
    %c0_i32_1 = arith.constant 0 : i32
    %c0_i32_2 = arith.constant 0 : i32
    return %c0_i32, %c0_i32_0, %c0_i32_1 : i32, i32, i32
  }
  func.func @transform_14(%arg0: i32) -> (i32, i32, i32) {
    %c0_i32 = arith.constant 0 : i32
    %c0_i32_0 = arith.constant 0 : i32
    %c0_i32_1 = arith.constant 0 : i32
    %c0_i32_2 = arith.constant 0 : i32
    return %c0_i32, %c0_i32_0, %c0_i32_1 : i32, i32, i32
  }
  func.func @transform_15(%arg0: i32) -> (i32, i32, i32) {
    %c0_i32 = arith.constant 0 : i32
    %c0_i32_0 = arith.constant 0 : i32
    %c0_i32_1 = arith.constant 0 : i32
    %c0_i32_2 = arith.constant 0 : i32
    return %c0_i32, %c0_i32_0, %c0_i32_1 : i32, i32, i32
  }
  func.func @transform_16(%arg0: i32) -> (i32, i32) {
    %c0_i32 = arith.constant 0 : i32
    %c0_i32_0 = arith.constant 0 : i32
    %c0_i32_1 = arith.constant 0 : i32
    return %c0_i32, %c0_i32_0 : i32, i32
  }
  func.func @transform_17(%arg0: i32) -> (i32, i32) {
    %c0_i32 = arith.constant 0 : i32
    %c0_i32_0 = arith.constant 0 : i32
    %c0_i32_1 = arith.constant 0 : i32
    return %c0_i32, %c0_i32_0 : i32, i32
  }
  func.func @transform_18(%arg0: i32) -> (i32, i32) {
    %c0_i32 = arith.constant 0 : i32
    %c0_i32_0 = arith.constant 0 : i32
    %c0_i32_1 = arith.constant 0 : i32
    return %c0_i32, %c0_i32_0 : i32, i32
  }
  func.func @transform_19(%arg0: i32) -> (i32, i32) {
    %c0_i32 = arith.constant 0 : i32
    %c0_i32_0 = arith.constant 0 : i32
    %c0_i32_1 = arith.constant 0 : i32
    return %c0_i32, %c0_i32_0 : i32, i32
  }
  func.func @transform_20(%arg0: i32) -> (i32, i32, i32) {
    %c0_i32 = arith.constant 0 : i32
    %c0_i32_0 = arith.constant 0 : i32
    %c0_i32_1 = arith.constant 0 : i32
    return %arg0, %c0_i32, %c0_i32_0 : i32, i32, i32
  }
}

</mosaic_0001>

<llo_original>
// kernel: bert_classifier_forward.1
$region0: #{bert_classifier_forward.1}
  #allocation0 [shape = 'u32[]', space=smem, size = 0x4, offset = 0x4, fixed_abs, tag = 'smem constant byte address 0x4 - core index']
  #allocation1 [shape = 'u32[72,128]{1,0:T(1,128)}', space=vmem, size = 0x9000, scoped, tag = 'internal scratch']
  #allocation2 [shape = 'f32[8,32]{1,0:T(8,128)}', space=vmem, size = 0x1000, scoped, tag = 'scratch operand']
  %s0 = inlined_call_operand.vmem [shape: f32[2,8,32], index: 0, kind: input, shape index: {}]
  %s1 = inlined_call_operand.vmem [shape: f32[2,1,8], index: 1, kind: input, shape index: {}]
  %s2 = inlined_call_operand.vmem [shape: f32[1,32], index: 2, kind: input, shape index: {}]
  %s3 = inlined_call_operand.vmem [shape: f32[1,32], index: 3, kind: input, shape index: {}]
  %s4 = inlined_call_operand.vmem [shape: bf16[2,32,96], index: 4, kind: input, shape index: {}]
  %s5 = inlined_call_operand.vmem [shape: f32[2,1,96], index: 5, kind: input, shape index: {}]
  %s6 = inlined_call_operand.vmem [shape: bf16[2,32,32], index: 6, kind: input, shape index: {}]
  %s7 = inlined_call_operand.vmem [shape: f32[2,1,32], index: 7, kind: input, shape index: {}]
  %s8 = inlined_call_operand.vmem [shape: f32[2,1,32], index: 8, kind: input, shape index: {}]
  %s9 = inlined_call_operand.vmem [shape: f32[2,1,32], index: 9, kind: input, shape index: {}]
  %s10 = inlined_call_operand.vmem [shape: bf16[2,32,64], index: 10, kind: input, shape index: {}]
  %s11 = inlined_call_operand.vmem [shape: f32[2,1,64], index: 11, kind: input, shape index: {}]
  %s12 = inlined_call_operand.vmem [shape: bf16[2,64,32], index: 12, kind: input, shape index: {}]
  %s13 = inlined_call_operand.vmem [shape: f32[2,1,32], index: 13, kind: input, shape index: {}]
  %s14 = inlined_call_operand.vmem [shape: f32[2,1,32], index: 14, kind: input, shape index: {}]
  %s15 = inlined_call_operand.vmem [shape: f32[2,1,32], index: 15, kind: input, shape index: {}]
  %s16 = inlined_call_operand.vmem [shape: bf16[32,128], index: 16, kind: input, shape index: {}]
  %s17 = inlined_call_operand.vmem [shape: f32[1,128], index: 17, kind: input, shape index: {}]
  %s18 = inlined_call_operand.vmem [shape: bf16[128,24], index: 18, kind: input, shape index: {}]
  %s19 = inlined_call_operand.vmem [shape: f32[1,24], index: 19, kind: input, shape index: {}]
  %s20 = inlined_call_operand.hbm [shape: f32[2,1,24], index: 20, kind: output, shape index: {}]
  %s21 = sld [smem:[#allocation0]]
  $region113: #{bert_classifier_forward.1} parent=0
    _
  %s23 = ssub.s32 1, %s21
  %s24 = scalar_select 0, %s23, %s21
  $region1: #{bert_classifier_forward.1} parent=0
    #allocation3 [shape = 'u8[1024]{0}', space=vmem, size = 0x400, scoped, tag = 'output window, operand 0']
    #allocation4 [shape = 's32[2]{0}', space=sflag, size = 0x8, scoped, tag = 'scoped memory for bert_classifier_forward.1']
    %25 = vsyncpa [#allocation4], 0
    %s26 = scalar_lea.sflag [#allocation4], 1
    %27 = vsyncpa %s26, 0
    loop: start=0, step=1, limit=4
    $region2: #{bert_classifier_forward.1} parent=1 // loop_pre_header
      _
    $region3: #{bert_classifier_forward.1} parent=1 // loop_header
      %s29 = sphi 0, %s33
      %p30 = scmp.ge.s32.totalorder %s29, 4
      %s39 = sphi 0, %s41
      %s42 = sphi 0, %s39
      %s43 = sphi 0, %s42
      %s59 = sphi 0, %s43
      %s65 = sphi 0, %s67
      %s68 = sphi 0, %s65
      %s69 = sphi 0, %s68
      %s85 = sphi 0, %s69
      %s89 = sphi 0, %s89
      %s91 = sphi 0, %s89
      %s92 = sphi 0, %s91
      %s106 = sphi 0, %s92
      %s110 = sphi 0, %s110
      %s112 = sphi 0, %s110
      %s113 = sphi 0, %s112
      %s127 = sphi 0, %s113
      %s131 = sphi 0, %s131
      %s133 = sphi 0, %s131
      %s134 = sphi 0, %s133
      %s148 = sphi 0, %s134
      %s152 = sphi 0, %s152
      %s154 = sphi 0, %s152
      %s155 = sphi 0, %s154
      %s169 = sphi 0, %s155
      %s173 = sphi 0, %s173
      %s175 = sphi 0, %s173
      %s176 = sphi 0, %s175
      %s190 = sphi 0, %s176
      %s194 = sphi 0, %s194
      %s196 = sphi 0, %s194
      %s197 = sphi 0, %s196
      %s211 = sphi 0, %s197
      %s215 = sphi 0, %s215
      %s217 = sphi 0, %s215
      %s218 = sphi 0, %s217
      %s232 = sphi 0, %s218
      %s236 = sphi 0, %s236
      %s238 = sphi 0, %s236
      %s239 = sphi 0, %s238
      %s253 = sphi 0, %s239
      %s257 = sphi 0, %s257
      %s259 = sphi 0, %s257
      %s260 = sphi 0, %s259
      %s274 = sphi 0, %s260
      %s278 = sphi 0, %s278
      %s280 = sphi 0, %s278
      %s281 = sphi 0, %s280
      %s295 = sphi 0, %s281
      %s299 = sphi 0, %s299
      %s301 = sphi 0, %s299
      %s302 = sphi 0, %s301
      %s316 = sphi 0, %s302
      %s320 = sphi 0, %s320
      %s322 = sphi 0, %s320
      %s323 = sphi 0, %s322
      %s337 = sphi 0, %s323
      %s341 = sphi 0, %s341
      %s343 = sphi 0, %s341
      %s344 = sphi 0, %s343
      %s358 = sphi 0, %s344
      %s362 = sphi 0, %s362
      %s364 = sphi 0, %s362
      %s365 = sphi 0, %s364
      %s379 = sphi 0, %s365
      %s383 = sphi 0, %s383
      %s385 = sphi 0, %s383
      %s386 = sphi 0, %s385
      %s400 = sphi 0, %s386
      %s404 = sphi 0, %s404
      %s406 = sphi 0, %s404
      %s407 = sphi 0, %s406
      %s421 = sphi 0, %s407
      %s425 = sphi 0, %s425
      %s427 = sphi 0, %s425
      %s428 = sphi 0, %s427
      %s442 = sphi 0, %s428
      %s446 = sphi 0, %s446
      %s448 = sphi 0, %s446
      %s449 = sphi 0, %s448
      %s463 = sphi 0, %s449
      %s469 = sphi 0, %s471
      %s472 = sphi 0, %s469
      %s473 = sphi 0, %s472
      %s489 = sphi 0, %s473
    $region4: #{bert_classifier_forward.1} parent=1 // loop_header_branch
      %32 = sbr.rel (%p30) target = $region8
    $region5: #{bert_classifier_forward.1} parent=1 // loop_body
      %s34 = ssub.s32 %s29, 1
      %s35 = ssub.s32 %s29, 2
      %s36 = sadd.s32 %s29, 1
      %s37 = ssub.s32 %s29, %s36
      %p38 = scmp.eq.s32.totalorder %s37, 0
      %s40 = sadd.s32 %s39, 1
      %s41 = scalar_select %p38, %s39, %s40
      %p44 = pneg %p38
      %p45 = scmp.eq.s32.totalorder %s29, 1
      %p46 = por %p44, %p45
      %p47 = scmp.ne.s32.totalorder %s39, %s42
      %p48 = scmp.eq.s32.totalorder %s29, 0
      %p49 = por %p47, %p48
      %p50 = scmp.ne.s32.totalorder %s39, %s42
      %p51 = scmp.eq.s32.totalorder %s34, 1
      %p52 = por %p50, %p51
      %p53 = scmp.ne.s32.totalorder %s42, %s43
      %p54 = scmp.eq.s32.totalorder %s34, 0
      %p55 = por %p53, %p54
      %p56 = scmp.ne.s32.totalorder %s42, %s43
      %p57 = scmp.eq.s32.totalorder %s35, 1
      %p58 = por %p56, %p57
      %p60 = scmp.ne.s32.totalorder %s43, %s59
      %p61 = scmp.eq.s32.totalorder %s35, 0
      %p62 = por %p60, %p61
      %s63 = ssub.s32 %s29, %s36
      %p64 = scmp.eq.s32.totalorder %s63, 0
      %s66 = sadd.s32 %s65, 1
      %s67 = scalar_select %p64, %s65, %s66
      %p70 = pneg %p64
      %p71 = scmp.eq.s32.totalorder %s29, 1
      %p72 = por %p70, %p71
      %p73 = scmp.ne.s32.totalorder %s65, %s68
      %p74 = scmp.eq.s32.totalorder %s29, 0
      %p75 = por %p73, %p74
      %p76 = scmp.ne.s32.totalorder %s65, %s68
      %p77 = scmp.eq.s32.totalorder %s34, 1
      %p78 = por %p76, %p77
      %p79 = scmp.ne.s32.totalorder %s68, %s69
      %p80 = scmp.eq.s32.totalorder %s34, 0
      %p81 = por %p79, %p80
      %p82 = scmp.ne.s32.totalorder %s68, %s69
      %p83 = scmp.eq.s32.totalorder %s35, 1
      %p84 = por %p82, %p83
      %p86 = scmp.ne.s32.totalorder %s69, %s85
      %p87 = scmp.eq.s32.totalorder %s35, 0
      %p88 = por %p86, %p87
      %s90 = sadd.s32 %s89, 1
      %p93 = scmp.eq.s32.totalorder %s29, 1
      %p94 = scmp.ne.s32.totalorder %s89, %s91
      %p95 = scmp.eq.s32.totalorder %s29, 0
      %p96 = por %p94, %p95
      %p97 = scmp.ne.s32.totalorder %s89, %s91
      %p98 = scmp.eq.s32.totalorder %s34, 1
      %p99 = por %p97, %p98
      %p100 = scmp.ne.s32.totalorder %s91, %s92
      %p101 = scmp.eq.s32.totalorder %s34, 0
      %p102 = por %p100, %p101
      %p103 = scmp.ne.s32.totalorder %s91, %s92
      %p104 = scmp.eq.s32.totalorder %s35, 1
      %p105 = por %p103, %p104
      %p107 = scmp.ne.s32.totalorder %s92, %s106
      %p108 = scmp.eq.s32.totalorder %s35, 0
      %p109 = por %p107, %p108
      %s111 = sadd.s32 %s110, 1
      %p114 = scmp.eq.s32.totalorder %s29, 1
      %p115 = scmp.ne.s32.totalorder %s110, %s112
      %p116 = scmp.eq.s32.totalorder %s29, 0
      %p117 = por %p115, %p116
      %p118 = scmp.ne.s32.totalorder %s110, %s112
      %p119 = scmp.eq.s32.totalorder %s34, 1
      %p120 = por %p118, %p119
      %p121 = scmp.ne.s32.totalorder %s112, %s113
      %p122 = scmp.eq.s32.totalorder %s34, 0
      %p123 = por %p121, %p122
      %p124 = scmp.ne.s32.totalorder %s112, %s113
      %p125 = scmp.eq.s32.totalorder %s35, 1
      %p126 = por %p124, %p125
      %p128 = scmp.ne.s32.totalorder %s113, %s127
      %p129 = scmp.eq.s32.totalorder %s35, 0
      %p130 = por %p128, %p129
      %s132 = sadd.s32 %s131, 1
      %p135 = scmp.eq.s32.totalorder %s29, 1
      %p136 = scmp.ne.s32.totalorder %s131, %s133
      %p137 = scmp.eq.s32.totalorder %s29, 0
      %p138 = por %p136, %p137
      %p139 = scmp.ne.s32.totalorder %s131, %s133
      %p140 = scmp.eq.s32.totalorder %s34, 1
      %p141 = por %p139, %p140
      %p142 = scmp.ne.s32.totalorder %s133, %s134
      %p143 = scmp.eq.s32.totalorder %s34, 0
      %p144 = por %p142, %p143
      %p145 = scmp.ne.s32.totalorder %s133, %s134
      %p146 = scmp.eq.s32.totalorder %s35, 1
      %p147 = por %p145, %p146
      %p149 = scmp.ne.s32.totalorder %s134, %s148
      %p150 = scmp.eq.s32.totalorder %s35, 0
      %p151 = por %p149, %p150
      %s153 = sadd.s32 %s152, 1
      %p156 = scmp.eq.s32.totalorder %s29, 1
      %p157 = scmp.ne.s32.totalorder %s152, %s154
      %p158 = scmp.eq.s32.totalorder %s29, 0
      %p159 = por %p157, %p158
      %p160 = scmp.ne.s32.totalorder %s152, %s154
      %p161 = scmp.eq.s32.totalorder %s34, 1
      %p162 = por %p160, %p161
      %p163 = scmp.ne.s32.totalorder %s154, %s155
      %p164 = scmp.eq.s32.totalorder %s34, 0
      %p165 = por %p163, %p164
      %p166 = scmp.ne.s32.totalorder %s154, %s155
      %p167 = scmp.eq.s32.totalorder %s35, 1
      %p168 = por %p166, %p167
      %p170 = scmp.ne.s32.totalorder %s155, %s169
      %p171 = scmp.eq.s32.totalorder %s35, 0
      %p172 = por %p170, %p171
      %s174 = sadd.s32 %s173, 1
      %p177 = scmp.eq.s32.totalorder %s29, 1
      %p178 = scmp.ne.s32.totalorder %s173, %s175
      %p179 = scmp.eq.s32.totalorder %s29, 0
      %p180 = por %p178, %p179
      %p181 = scmp.ne.s32.totalorder %s173, %s175
      %p182 = scmp.eq.s32.totalorder %s34, 1
      %p183 = por %p181, %p182
      %p184 = scmp.ne.s32.totalorder %s175, %s176
      %p185 = scmp.eq.s32.totalorder %s34, 0
      %p186 = por %p184, %p185
      %p187 = scmp.ne.s32.totalorder %s175, %s176
      %p188 = scmp.eq.s32.totalorder %s35, 1
      %p189 = por %p187, %p188
      %p191 = scmp.ne.s32.totalorder %s176, %s190
      %p192 = scmp.eq.s32.totalorder %s35, 0
      %p193 = por %p191, %p192
      %s195 = sadd.s32 %s194, 1
      %p198 = scmp.eq.s32.totalorder %s29, 1
      %p199 = scmp.ne.s32.totalorder %s194, %s196
      %p200 = scmp.eq.s32.totalorder %s29, 0
      %p201 = por %p199, %p200
      %p202 = scmp.ne.s32.totalorder %s194, %s196
      %p203 = scmp.eq.s32.totalorder %s34, 1
      %p204 = por %p202, %p203
      %p205 = scmp.ne.s32.totalorder %s196, %s197
      %p206 = scmp.eq.s32.totalorder %s34, 0
      %p207 = por %p205, %p206
      %p208 = scmp.ne.s32.totalorder %s196, %s197
      %p209 = scmp.eq.s32.totalorder %s35, 1
      %p210 = por %p208, %p209
      %p212 = scmp.ne.s32.totalorder %s197, %s211
      %p213 = scmp.eq.s32.totalorder %s35, 0
      %p214 = por %p212, %p213
      %s216 = sadd.s32 %s215, 1
      %p219 = scmp.eq.s32.totalorder %s29, 1
      %p220 = scmp.ne.s32.totalorder %s215, %s217
      %p221 = scmp.eq.s32.totalorder %s29, 0
      %p222 = por %p220, %p221
      %p223 = scmp.ne.s32.totalorder %s215, %s217
      %p224 = scmp.eq.s32.totalorder %s34, 1
      %p225 = por %p223, %p224
      %p226 = scmp.ne.s32.totalorder %s217, %s218
      %p227 = scmp.eq.s32.totalorder %s34, 0
      %p228 = por %p226, %p227
      %p229 = scmp.ne.s32.totalorder %s217, %s218
      %p230 = scmp.eq.s32.totalorder %s35, 1
      %p231 = por %p229, %p230
      %p233 = scmp.ne.s32.totalorder %s218, %s232
      %p234 = scmp.eq.s32.totalorder %s35, 0
      %p235 = por %p233, %p234
      %s237 = sadd.s32 %s236, 1
      %p240 = scmp.eq.s32.totalorder %s29, 1
      %p241 = scmp.ne.s32.totalorder %s236, %s238
      %p242 = scmp.eq.s32.totalorder %s29, 0
      %p243 = por %p241, %p242
      %p244 = scmp.ne.s32.totalorder %s236, %s238
      %p245 = scmp.eq.s32.totalorder %s34, 1
      %p246 = por %p244, %p245
      %p247 = scmp.ne.s32.totalorder %s238, %s239
      %p248 = scmp.eq.s32.totalorder %s34, 0
      %p249 = por %p247, %p248
      %p250 = scmp.ne.s32.totalorder %s238, %s239
      %p251 = scmp.eq.s32.totalorder %s35, 1
      %p252 = por %p250, %p251
      %p254 = scmp.ne.s32.totalorder %s239, %s253
      %p255 = scmp.eq.s32.totalorder %s35, 0
      %p256 = por %p254, %p255
      %s258 = sadd.s32 %s257, 1
      %p261 = scmp.eq.s32.totalorder %s29, 1
      %p262 = scmp.ne.s32.totalorder %s257, %s259
      %p263 = scmp.eq.s32.totalorder %s29, 0
      %p264 = por %p262, %p263
      %p265 = scmp.ne.s32.totalorder %s257, %s259
      %p266 = scmp.eq.s32.totalorder %s34, 1
      %p267 = por %p265, %p266
      %p268 = scmp.ne.s32.totalorder %s259, %s260
      %p269 = scmp.eq.s32.totalorder %s34, 0
      %p270 = por %p268, %p269
      %p271 = scmp.ne.s32.totalorder %s259, %s260
      %p272 = scmp.eq.s32.totalorder %s35, 1
      %p273 = por %p271, %p272
      %p275 = scmp.ne.s32.totalorder %s260, %s274
      %p276 = scmp.eq.s32.totalorder %s35, 0
      %p277 = por %p275, %p276
      %s279 = sadd.s32 %s278, 1
      %p282 = scmp.eq.s32.totalorder %s29, 1
      %p283 = scmp.ne.s32.totalorder %s278, %s280
      %p284 = scmp.eq.s32.totalorder %s29, 0
      %p285 = por %p283, %p284
      %p286 = scmp.ne.s32.totalorder %s278, %s280
      %p287 = scmp.eq.s32.totalorder %s34, 1
      %p288 = por %p286, %p287
      %p289 = scmp.ne.s32.totalorder %s280, %s281
      %p290 = scmp.eq.s32.totalorder %s34, 0
      %p291 = por %p289, %p290
      %p292 = scmp.ne.s32.totalorder %s280, %s281
      %p293 = scmp.eq.s32.totalorder %s35, 1
      %p294 = por %p292, %p293
      %p296 = scmp.ne.s32.totalorder %s281, %s295
      %p297 = scmp.eq.s32.totalorder %s35, 0
      %p298 = por %p296, %p297
      %s300 = sadd.s32 %s299, 1
      %p303 = scmp.eq.s32.totalorder %s29, 1
      %p304 = scmp.ne.s32.totalorder %s299, %s301
      %p305 = scmp.eq.s32.totalorder %s29, 0
      %p306 = por %p304, %p305
      %p307 = scmp.ne.s32.totalorder %s299, %s301
      %p308 = scmp.eq.s32.totalorder %s34, 1
      %p309 = por %p307, %p308
      %p310 = scmp.ne.s32.totalorder %s301, %s302
      %p311 = scmp.eq.s32.totalorder %s34, 0
      %p312 = por %p310, %p311
      %p313 = scmp.ne.s32.totalorder %s301, %s302
      %p314 = scmp.eq.s32.totalorder %s35, 1
      %p315 = por %p313, %p314
      %p317 = scmp.ne.s32.totalorder %s302, %s316
      %p318 = scmp.eq.s32.totalorder %s35, 0
      %p319 = por %p317, %p318
      %s321 = sadd.s32 %s320, 1
      %p324 = scmp.eq.s32.totalorder %s29, 1
      %p325 = scmp.ne.s32.totalorder %s320, %s322
      %p326 = scmp.eq.s32.totalorder %s29, 0
      %p327 = por %p325, %p326
      %p328 = scmp.ne.s32.totalorder %s320, %s322
      %p329 = scmp.eq.s32.totalorder %s34, 1
      %p330 = por %p328, %p329
      %p331 = scmp.ne.s32.totalorder %s322, %s323
      %p332 = scmp.eq.s32.totalorder %s34, 0
      %p333 = por %p331, %p332
      %p334 = scmp.ne.s32.totalorder %s322, %s323
      %p335 = scmp.eq.s32.totalorder %s35, 1
      %p336 = por %p334, %p335
      %p338 = scmp.ne.s32.totalorder %s323, %s337
      %p339 = scmp.eq.s32.totalorder %s35, 0
      %p340 = por %p338, %p339
      %s342 = sadd.s32 %s341, 1
      %p345 = scmp.eq.s32.totalorder %s29, 1
      %p346 = scmp.ne.s32.totalorder %s341, %s343
      %p347 = scmp.eq.s32.totalorder %s29, 0
      %p348 = por %p346, %p347
      %p349 = scmp.ne.s32.totalorder %s341, %s343
      %p350 = scmp.eq.s32.totalorder %s34, 1
      %p351 = por %p349, %p350
      %p352 = scmp.ne.s32.totalorder %s343, %s344
      %p353 = scmp.eq.s32.totalorder %s34, 0
      %p354 = por %p352, %p353
      %p355 = scmp.ne.s32.totalorder %s343, %s344
      %p356 = scmp.eq.s32.totalorder %s35, 1
      %p357 = por %p355, %p356
      %p359 = scmp.ne.s32.totalorder %s344, %s358
      %p360 = scmp.eq.s32.totalorder %s35, 0
      %p361 = por %p359, %p360
      %s363 = sadd.s32 %s362, 1
      %p366 = scmp.eq.s32.totalorder %s29, 1
      %p367 = scmp.ne.s32.totalorder %s362, %s364
      %p368 = scmp.eq.s32.totalorder %s29, 0
      %p369 = por %p367, %p368
      %p370 = scmp.ne.s32.totalorder %s362, %s364
      %p371 = scmp.eq.s32.totalorder %s34, 1
      %p372 = por %p370, %p371
      %p373 = scmp.ne.s32.totalorder %s364, %s365
      %p374 = scmp.eq.s32.totalorder %s34, 0
      %p375 = por %p373, %p374
      %p376 = scmp.ne.s32.totalorder %s364, %s365
      %p377 = scmp.eq.s32.totalorder %s35, 1
      %p378 = por %p376, %p377
      %p380 = scmp.ne.s32.totalorder %s365, %s379
      %p381 = scmp.eq.s32.totalorder %s35, 0
      %p382 = por %p380, %p381
      %s384 = sadd.s32 %s383, 1
      %p387 = scmp.eq.s32.totalorder %s29, 1
      %p388 = scmp.ne.s32.totalorder %s383, %s385
      %p389 = scmp.eq.s32.totalorder %s29, 0
      %p390 = por %p388, %p389
      %p391 = scmp.ne.s32.totalorder %s383, %s385
      %p392 = scmp.eq.s32.totalorder %s34, 1
      %p393 = por %p391, %p392
      %p394 = scmp.ne.s32.totalorder %s385, %s386
      %p395 = scmp.eq.s32.totalorder %s34, 0
      %p396 = por %p394, %p395
      %p397 = scmp.ne.s32.totalorder %s385, %s386
      %p398 = scmp.eq.s32.totalorder %s35, 1
      %p399 = por %p397, %p398
      %p401 = scmp.ne.s32.totalorder %s386, %s400
      %p402 = scmp.eq.s32.totalorder %s35, 0
      %p403 = por %p401, %p402
      %s405 = sadd.s32 %s404, 1
      %p408 = scmp.eq.s32.totalorder %s29, 1
      %p409 = scmp.ne.s32.totalorder %s404, %s406
      %p410 = scmp.eq.s32.totalorder %s29, 0
      %p411 = por %p409, %p410
      %p412 = scmp.ne.s32.totalorder %s404, %s406
      %p413 = scmp.eq.s32.totalorder %s34, 1
      %p414 = por %p412, %p413
      %p415 = scmp.ne.s32.totalorder %s406, %s407
      %p416 = scmp.eq.s32.totalorder %s34, 0
      %p417 = por %p415, %p416
      %p418 = scmp.ne.s32.totalorder %s406, %s407
      %p419 = scmp.eq.s32.totalorder %s35, 1
      %p420 = por %p418, %p419
      %p422 = scmp.ne.s32.totalorder %s407, %s421
      %p423 = scmp.eq.s32.totalorder %s35, 0
      %p424 = por %p422, %p423
      %s426 = sadd.s32 %s425, 1
      %p429 = scmp.eq.s32.totalorder %s29, 1
      %p430 = scmp.ne.s32.totalorder %s425, %s427
      %p431 = scmp.eq.s32.totalorder %s29, 0
      %p432 = por %p430, %p431
      %p433 = scmp.ne.s32.totalorder %s425, %s427
      %p434 = scmp.eq.s32.totalorder %s34, 1
      %p435 = por %p433, %p434
      %p436 = scmp.ne.s32.totalorder %s427, %s428
      %p437 = scmp.eq.s32.totalorder %s34, 0
      %p438 = por %p436, %p437
      %p439 = scmp.ne.s32.totalorder %s427, %s428
      %p440 = scmp.eq.s32.totalorder %s35, 1
      %p441 = por %p439, %p440
      %p443 = scmp.ne.s32.totalorder %s428, %s442
      %p444 = scmp.eq.s32.totalorder %s35, 0
      %p445 = por %p443, %p444
      %s447 = sadd.s32 %s446, 1
      %p450 = scmp.eq.s32.totalorder %s29, 1
      %p451 = scmp.ne.s32.totalorder %s446, %s448
      %p452 = scmp.eq.s32.totalorder %s29, 0
      %p453 = por %p451, %p452
      %p454 = scmp.ne.s32.totalorder %s446, %s448
      %p455 = scmp.eq.s32.totalorder %s34, 1
      %p456 = por %p454, %p455
      %p457 = scmp.ne.s32.totalorder %s448, %s449
      %p458 = scmp.eq.s32.totalorder %s34, 0
      %p459 = por %p457, %p458
      %p460 = scmp.ne.s32.totalorder %s448, %s449
      %p461 = scmp.eq.s32.totalorder %s35, 1
      %p462 = por %p460, %p461
      %p464 = scmp.ne.s32.totalorder %s449, %s463
      %p465 = scmp.eq.s32.totalorder %s35, 0
      %p466 = por %p464, %p465
      %s467 = ssub.s32 %s29, %s36
      %p468 = scmp.eq.s32.totalorder %s467, 0
      %s470 = sadd.s32 %s469, 1
      %s471 = scalar_select %p468, %s469, %s470
      %p474 = pneg %p468
      %p475 = scmp.eq.s32.totalorder %s29, 1
      %p476 = por %p474, %p475
      %p477 = scmp.ne.s32.totalorder %s469, %s472
      %p478 = scmp.eq.s32.totalorder %s29, 0
      %p479 = por %p477, %p478
      %p480 = scmp.ne.s32.totalorder %s469, %s472
      %p481 = scmp.eq.s32.totalorder %s34, 1
      %p482 = por %p480, %p481
      %p483 = scmp.ne.s32.totalorder %s472, %s473
      %p484 = scmp.eq.s32.totalorder %s34, 0
      %p485 = por %p483, %p484
      %p486 = scmp.ne.s32.totalorder %s472, %s473
      %p487 = scmp.eq.s32.totalorder %s35, 1
      %p488 = por %p486, %p487
      %p490 = scmp.ne.s32.totalorder %s473, %s489
      %p491 = scmp.eq.s32.totalorder %s35, 0
      %p492 = por %p490, %p491
      %p493 = scmp.le.s32.totalorder 1, %s29
      %p494 = scmp.lt.s32.totalorder %s29, 3
      %p495 = pnand %p493, %p494
      %p496 = pneg %p495
      // Predicated region
      $region9: #{bert_classifier_forward.1} parent=5 // pred_check
        _
      $region10: #{bert_classifier_forward.1} parent=5 // pred_check_branch
        %498 = sbr.rel (%p495) target = $region12
      $region11: #{bert_classifier_forward.1} parent=5 // pred_region
        %s499 = ssub.s32 %s29, 1
        // Predicated region
        $region13: #{bert_classifier_forward.1} parent=11 // pred_check
          %p500 = pneg %p102
        $region14: #{bert_classifier_forward.1} parent=11 // pred_check_branch
          %502 = sbr.rel (%p500) target = $region16
        $region15: #{bert_classifier_forward.1} parent=11 // pred_region
          _
        $region16: #{bert_classifier_forward.1} parent=11 // pred_fallthru
          _
        // Predicated region
        $region17: #{bert_classifier_forward.1} parent=11 // pred_check
          %p503 = pneg %p123
        $region18: #{bert_classifier_forward.1} parent=11 // pred_check_branch
          %505 = sbr.rel (%p503) target = $region20
        $region19: #{bert_classifier_forward.1} parent=11 // pred_region
          _
        $region20: #{bert_classifier_forward.1} parent=11 // pred_fallthru
          _
        // Predicated region
        $region21: #{bert_classifier_forward.1} parent=11 // pred_check
          %p506 = pneg %p144
        $region22: #{bert_classifier_forward.1} parent=11 // pred_check_branch
          %508 = sbr.rel (%p506) target = $region24
        $region23: #{bert_classifier_forward.1} parent=11 // pred_region
          _
        $region24: #{bert_classifier_forward.1} parent=11 // pred_fallthru
          _
        // Predicated region
        $region25: #{bert_classifier_forward.1} parent=11 // pred_check
          %p509 = pneg %p165
        $region26: #{bert_classifier_forward.1} parent=11 // pred_check_branch
          %511 = sbr.rel (%p509) target = $region28
        $region27: #{bert_classifier_forward.1} parent=11 // pred_region
          _
        $region28: #{bert_classifier_forward.1} parent=11 // pred_fallthru
          _
        // Predicated region
        $region29: #{bert_classifier_forward.1} parent=11 // pred_check
          %p512 = pneg %p186
        $region30: #{bert_classifier_forward.1} parent=11 // pred_check_branch
          %514 = sbr.rel (%p512) target = $region32
        $region31: #{bert_classifier_forward.1} parent=11 // pred_region
          _
        $region32: #{bert_classifier_forward.1} parent=11 // pred_fallthru
          _
        // Predicated region
        $region33: #{bert_classifier_forward.1} parent=11 // pred_check
          %p515 = pneg %p207
        $region34: #{bert_classifier_forward.1} parent=11 // pred_check_branch
          %517 = sbr.rel (%p515) target = $region36
        $region35: #{bert_classifier_forward.1} parent=11 // pred_region
          _
        $region36: #{bert_classifier_forward.1} parent=11 // pred_fallthru
          _
        // Predicated region
        $region37: #{bert_classifier_forward.1} parent=11 // pred_check
          %p518 = pneg %p228
        $region38: #{bert_classifier_forward.1} parent=11 // pred_check_branch
          %520 = sbr.rel (%p518) target = $region40
        $region39: #{bert_classifier_forward.1} parent=11 // pred_region
          _
        $region40: #{bert_classifier_forward.1} parent=11 // pred_fallthru
          _
        // Predicated region
        $region41: #{bert_classifier_forward.1} parent=11 // pred_check
          %p521 = pneg %p249
        $region42: #{bert_classifier_forward.1} parent=11 // pred_check_branch
          %523 = sbr.rel (%p521) target = $region44
        $region43: #{bert_classifier_forward.1} parent=11 // pred_region
          _
        $region44: #{bert_classifier_forward.1} parent=11 // pred_fallthru
          _
        // Predicated region
        $region45: #{bert_classifier_forward.1} parent=11 // pred_check
          %p524 = pneg %p270
        $region46: #{bert_classifier_forward.1} parent=11 // pred_check_branch
          %526 = sbr.rel (%p524) target = $region48
        $region47: #{bert_classifier_forward.1} parent=11 // pred_region
          _
        $region48: #{bert_classifier_forward.1} parent=11 // pred_fallthru
          _
        // Predicated region
        $region49: #{bert_classifier_forward.1} parent=11 // pred_check
          %p527 = pneg %p291
        $region50: #{bert_classifier_forward.1} parent=11 // pred_check_branch
          %529 = sbr.rel (%p527) target = $region52
        $region51: #{bert_classifier_forward.1} parent=11 // pred_region
          _
        $region52: #{bert_classifier_forward.1} parent=11 // pred_fallthru
          _
        // Predicated region
        $region53: #{bert_classifier_forward.1} parent=11 // pred_check
          %p530 = pneg %p312
        $region54: #{bert_classifier_forward.1} parent=11 // pred_check_branch
          %532 = sbr.rel (%p530) target = $region56
        $region55: #{bert_classifier_forward.1} parent=11 // pred_region
          _
        $region56: #{bert_classifier_forward.1} parent=11 // pred_fallthru
          _
        // Predicated region
        $region57: #{bert_classifier_forward.1} parent=11 // pred_check
          %p533 = pneg %p333
        $region58: #{bert_classifier_forward.1} parent=11 // pred_check_branch
          %535 = sbr.rel (%p533) target = $region60
        $region59: #{bert_classifier_forward.1} parent=11 // pred_region
          _
        $region60: #{bert_classifier_forward.1} parent=11 // pred_fallthru
          _
        // Predicated region
        $region61: #{bert_classifier_forward.1} parent=11 // pred_check
          %p536 = pneg %p354
        $region62: #{bert_classifier_forward.1} parent=11 // pred_check_branch
          %538 = sbr.rel (%p536) target = $region64
        $region63: #{bert_classifier_forward.1} parent=11 // pred_region
          _
        $region64: #{bert_classifier_forward.1} parent=11 // pred_fallthru
          _
        // Predicated region
        $region65: #{bert_classifier_forward.1} parent=11 // pred_check
          %p539 = pneg %p375
        $region66: #{bert_classifier_forward.1} parent=11 // pred_check_branch
          %541 = sbr.rel (%p539) target = $region68
        $region67: #{bert_classifier_forward.1} parent=11 // pred_region
          _
        $region68: #{bert_classifier_forward.1} parent=11 // pred_fallthru
          _
        // Predicated region
        $region69: #{bert_classifier_forward.1} parent=11 // pred_check
          %p542 = pneg %p396
        $region70: #{bert_classifier_forward.1} parent=11 // pred_check_branch
          %544 = sbr.rel (%p542) target = $region72
        $region71: #{bert_classifier_forward.1} parent=11 // pred_region
          _
        $region72: #{bert_classifier_forward.1} parent=11 // pred_fallthru
          _
        // Predicated region
        $region73: #{bert_classifier_forward.1} parent=11 // pred_check
          %p545 = pneg %p417
        $region74: #{bert_classifier_forward.1} parent=11 // pred_check_branch
          %547 = sbr.rel (%p545) target = $region76
        $region75: #{bert_classifier_forward.1} parent=11 // pred_region
          _
        $region76: #{bert_classifier_forward.1} parent=11 // pred_fallthru
          _
        // Predicated region
        $region77: #{bert_classifier_forward.1} parent=11 // pred_check
          %p548 = pneg %p438
        $region78: #{bert_classifier_forward.1} parent=11 // pred_check_branch
          %550 = sbr.rel (%p548) target = $region80
        $region79: #{bert_classifier_forward.1} parent=11 // pred_region
          _
        $region80: #{bert_classifier_forward.1} parent=11 // pred_fallthru
          _
        // Predicated region
        $region81: #{bert_classifier_forward.1} parent=11 // pred_check
          %p551 = pneg %p459
        $region82: #{bert_classifier_forward.1} parent=11 // pred_check_branch
          %553 = sbr.rel (%p551) target = $region84
        $region83: #{bert_classifier_forward.1} parent=11 // pred_region
          _
        $region84: #{bert_classifier_forward.1} parent=11 // pred_fallthru
          _
      $region12: #{bert_classifier_forward.1} parent=5 // pred_fallthru
        _
      %p554 = scmp.lt.s32.totalorder %s29, 2
      // Predicated region
      $region85: #{bert_classifier_forward.1} parent=5 // pred_check
        %p555 = pneg %p554
      $region86: #{bert_classifier_forward.1} parent=5 // pred_check_branch
        %557 = sbr.rel (%p555) target = $region88
      $region87: #{bert_classifier_forward.1} parent=5 // pred_region
        // Predicated region
        $region89: #{bert_classifier_forward.1} parent=87 // pred_check
          %p558 = pneg %p49
        $region90: #{bert_classifier_forward.1} parent=87 // pred_check_branch
          %560 = sbr.rel (%p558) target = $region92
        $region91: #{bert_classifier_forward.1} parent=87 // pred_region
          %p561 = scmp.lt.s32.totalorder %s29, 1
          %s562 = scalar_select %p561, %s29, 1
          %s563 = smul.addr %s562, 8
          %s564 = scalar_lea.vmem %s0, %s563
        $region92: #{bert_classifier_forward.1} parent=87 // pred_fallthru
          _
        // Predicated region
        $region93: #{bert_classifier_forward.1} parent=87 // pred_check
          %p565 = pneg %p75
        $region94: #{bert_classifier_forward.1} parent=87 // pred_check_branch
          %567 = sbr.rel (%p565) target = $region96
        $region95: #{bert_classifier_forward.1} parent=87 // pred_region
          %p568 = scmp.lt.s32.totalorder %s29, 1
          %s569 = scalar_select %p568, %s29, 1
          %s570 = scalar_lea.vmem %s1, %s569
        $region96: #{bert_classifier_forward.1} parent=87 // pred_fallthru
          _
      $region88: #{bert_classifier_forward.1} parent=5 // pred_fallthru
        _
      %p571 = scmp.le.s32.totalorder 1, %s29
      %p572 = scmp.lt.s32.totalorder %s29, 3
      %p573 = pnand %p571, %p572
      %p574 = pneg %p573
      // Predicated region
      $region97: #{bert_classifier_forward.1} parent=5 // pred_check
        _
      $region98: #{bert_classifier_forward.1} parent=5 // pred_check_branch
        %576 = sbr.rel (%p573) target = $region100
      $region99: #{bert_classifier_forward.1} parent=5 // pred_region
        %s577 = ssub.s32 %s29, 1
        %p578 = scmp.lt.s32.totalorder %s34, 1
        %s579 = scalar_select %p578, %s34, 1
        %s580 = smul.addr %s579, 8
        %s581 = scalar_lea.vmem %s0, %s580
        %p582 = pneg %p55
        %p583 = pneg %p52
        %p584 = scmp.lt.s32.totalorder %s34, 1
        %s585 = scalar_select %p584, %s34, 1
        %s586 = scalar_lea.vmem %s1, %s585
        %p587 = pneg %p81
        %p588 = pneg %p78
        %p589 = pneg %p102
        %p590 = pneg %p99
        %p591 = pneg %p123
        %p592 = pneg %p120
        %p593 = pneg %p144
        %p594 = pneg %p141
        %p595 = pneg %p165
        %p596 = pneg %p162
        %p597 = pneg %p186
        %p598 = pneg %p183
        %p599 = pneg %p207
        %p600 = pneg %p204
        %p601 = pneg %p228
        %p602 = pneg %p225
        %p603 = pneg %p249
        %p604 = pneg %p246
        %p605 = pneg %p270
        %p606 = pneg %p267
        %p607 = pneg %p291
        %p608 = pneg %p288
        %p609 = pneg %p312
        %p610 = pneg %p309
        %p611 = pneg %p333
        %p612 = pneg %p330
        %p613 = pneg %p354
        %p614 = pneg %p351
        %p615 = pneg %p375
        %p616 = pneg %p372
        %p617 = pneg %p396
        %p618 = pneg %p393
        %p619 = pneg %p417
        %p620 = pneg %p414
        %p621 = pneg %p438
        %p622 = pneg %p435
        %p623 = pneg %p459
        %p624 = pneg %p456
        %p625 = pneg %p485
        %p626 = pneg %p482
        %s627 = sand.u32 %s472, 1
        %s628 = scalar_lea.sflag [#allocation4], %s627
        %s629 = sand.u32 %s472, 1
        %s630 = scalar_lea.vmem [#allocation3], %s629
        %p631 = scmp.lt.s32.totalorder %s34, 1
        %s632 = scalar_select %p631, %s34, 1
        %s633 = smul.addr %s632, 8
        %s634 = scalar_lea.vmem %s0, %s633
        %p635 = scmp.lt.s32.totalorder %s34, 1
        %s636 = scalar_select %p635, %s34, 1
        %s637 = scalar_lea.vmem %s1, %s636
        %v639 = vld [vmem:[%s634] sm:$0xff]
        %v640 = vld [vmem:[%s2] sm:$0x1]
        %v641 = vld [vmem:[%s3] sm:$0x1]
        %vm642 = vcmask 261120
        %v643 = vsel %vm642, %v639, 0.0
        %644 = vadd.xlane.f32.xlu0 %v643
        %v645 = vpop.xlane.xlu0 %644
        %v646 = vrcp.pop 32.0
        %v647 = vmul.f32 32.0, %v646
        %v648 = vsub.f32 1.0, %v647
        %v649 = vmul.f32 %v646, %v648
        %v650 = vadd.f32 %v646, %v649
        %vm651 = vweird.f32 %v646
        %v652 = vsel %vm651, %v646, %v650
        %v653 = vmul.f32 %v645, %v652
        %v654 = vsub.f32 %v639, %v653
        %v655 = vmul.f32 %v654, %v654
        %v656 = vsel %vm642, %v655, 0.0
        %657 = vadd.xlane.f32.xlu0 %v656
        %v658 = vpop.xlane.xlu0 %657
        %v659 = vmul.f32 %v658, %v652
        %v660 = vadd.f32 %v659, 1e-12
        %v661 = vrsqrt.pop %v660
        %v662 = vmul.f32 %v661, %v660
        %v663 = vmul.f32 %v662, %v661
        %v664 = vmul.f32 0.5, %v663
        %v665 = vsub.f32 1.5, %v664
        %v666 = vmul.f32 %v661, %v665
        %vm667 = vweird.f32 %v660
        %vm668 = vweird.f32 %v661
        %vm669 = vmor %vm667, %vm668
        %v670 = vsel %vm669, %v661, %v666
        %v671 = vmul.f32 %v654, %v670
        %v673 = vperm.slane %v640, 0
        %v675 = vmul.f32 %v671, %v673
        %v677 = vperm.slane %v641, 0
        %v679 = vadd.f32 %v675, %v677
        %v680 = vld [vmem:[%s637] sm:$0x1]
        %v681 = vpack.c.bf16 %v679, %v679
        %v682 = vld [vmem:[%s4] sm:$0xf]
        %v683 = vld [vmem:[%s4 + $0x4] sm:$0xf]
        %v684 = vld [vmem:[%s4 + $0x8] sm:$0xf]
        %v685 = vld [vmem:[%s4 + $0xc] sm:$0xf]
        %v686 = vld [vmem:[%s5] sm:$0x1]
        %v688 = vperm.slane %v686, 0
        %v694 = vunpack.c.l.b16 %v682
        %v695 = vunpack.c.l.b16 %v683
        %v696 = vunpack.c.l.b16 %v684
        %v697 = vunpack.c.l.b16 %v685
        %v698 = vpack.c.b16 %v695, %v694
        %v699 = vpack.c.b16 %v697, %v696
        %v703 = vsel %vm642, %v681, 0
        %705 = vmatpush.bf16.msra.mxu0 0
        %706 = vmatpush.bf16.msra.mxu0 0
        %707 = vmatpush.bf16.msra.mxu0 0
        %708 = vmatpush.bf16.msra.mxu0 0
        %709 = vmatpush.bf16.msra.mxu0 0
        %710 = vmatpush.bf16.msra.mxu0 0
        %711 = vmatpush.bf16.msra.mxu0 %v699
        %712 = vmatpush.bf16.msra.mxu0 %v698
        %713 = vmatmul.bf16.gmra.mxu0 %v703
        %v714 = vpop.f32.mrf.mxu0
        %v715 = vadd.f32 %v688, %v714
        %v716 = vpop.f32.mrf.mxu0
        %717 = vdwg.mxu0
        %v718 = vpack.c.bf16 %v715, %v715
        %720 = vrot.lane.b32.xlu0 %v718, 96
        %v721 = vpop.permute.xlu0 %720
        %vm722 = vcmask 130048
        %v724 = vsel %vm722, %v718, 0
        %v727 = vsel %vm722, %v721, 0
        %729 = vmatpush.bf16.xpose.msra.mxu0 0
        %730 = vmatpush.bf16.xpose.msra.mxu0 0
        %731 = vmatpush.bf16.xpose.msra.mxu0 0
        %732 = vmatpush.bf16.xpose.msra.mxu0 0
        %733 = vmatpush.bf16.xpose.msra.mxu0 0
        %734 = vmatpush.bf16.xpose.msra.mxu0 0
        %735 = vmatpush.bf16.xpose.msra.mxu0 0
        %736 = vmatpush.bf16.xpose.msra.mxu0 %v727
        %737 = vmatmul.bf16.gmra.mxu0 %v724
        %v738 = vpop.f32.mrf.mxu0
        %v739 = vadd.f32 0.0, %v738
        %v740 = vpop.f32.mrf.mxu0
        %741 = vdwg.mxu0
        %v742 = vmul.f32 %v739, 0.25
        %v744 = vperm.slane %v680, 0
        %v746 = vadd.f32 %v742, %v744
        %vm747 = vcmask 64512
        %v748 = vsel %vm747, %v746, -inf
        %749 = vmax.xlane.f32.xlu0 %v748
        %v750 = vpop.xlane.xlu0 %749
        %v751 = vsub.f32 %v746, %v750
        %v752 = vmul.f32 %v751, 1.442695
        %v753 = vpow.pop %v752
        %v754 = vsel %vm747, %v753, 0.0
        %755 = vadd.xlane.f32.xlu0 %v754
        %v756 = vpop.xlane.xlu0 %755
        %v757 = vrcp.pop %v756
        %v758 = vmul.f32 %v756, %v757
        %v759 = vsub.f32 1.0, %v758
        %v760 = vmul.f32 %v757, %v759
        %v761 = vadd.f32 %v757, %v760
        %vm762 = vweird.f32 %v756
        %vm763 = vweird.f32 %v757
        %vm764 = vmor %vm762, %vm763
        %v765 = vsel %vm764, %v757, %v761
        %v766 = vand.u32 2147483647, %v756
        %vm767 = vcmp.eq.f32.partialorder %v766, 8.507059e+37
        %v768 = vand.u32 %v756, 2147483648
        %v769 = vor.u32 1.1754944e-38, %v768
        %v770 = vsel %vm767, %v769, %v765
        %v771 = vmul.f32 %v753, %v770
        %v772 = vpack.c.bf16 %v771, %v771
        %773 = vrot.lane.b32.xlu0 %v718, 64
        %v774 = vpop.permute.xlu0 %773
        %v776 = vsel %vm747, %v772, 0
        %vm778 = vcmask 1043456
        %v780 = vsel %vm778, %v774, 0
        %782 = vmatpush.bf16.msra.mxu0 0
        %783 = vmatpush.bf16.msra.mxu0 0
        %784 = vmatpush.bf16.msra.mxu0 0
        %785 = vmatpush.bf16.msra.mxu0 0
        %786 = vmatpush.bf16.msra.mxu0 0
        %787 = vmatpush.bf16.msra.mxu0 0
        %788 = vmatpush.bf16.msra.mxu0 0
        %789 = vmatpush.bf16.msra.mxu0 %v780
        %790 = vmatmul.bf16.gmra.mxu0 %v776
        %v791 = vpop.f32.mrf.mxu0
        %v792 = vadd.f32 0.0, %v791
        %v793 = vpop.f32.mrf.mxu0
        %794 = vdwg.mxu0
        %795 = vst.msk [vmem:[#allocation2] sm:$0xff] %vm722, %v792
        %796 = vrot.lane.b32.xlu0 %v718, 112
        %v797 = vpop.permute.xlu0 %796
        %798 = vrot.lane.b32.xlu0 %v718, 80
        %v799 = vpop.permute.xlu0 %798
        %v801 = vsel %vm722, %v797, 0
        %v804 = vsel %vm722, %v799, 0
        %806 = vmatpush.bf16.xpose.msra.mxu0 0
        %807 = vmatpush.bf16.xpose.msra.mxu0 0
        %808 = vmatpush.bf16.xpose.msra.mxu0 0
        %809 = vmatpush.bf16.xpose.msra.mxu0 0
        %810 = vmatpush.bf16.xpose.msra.mxu0 0
        %811 = vmatpush.bf16.xpose.msra.mxu0 0
        %812 = vmatpush.bf16.xpose.msra.mxu0 0
        %813 = vmatpush.bf16.xpose.msra.mxu0 %v804
        %814 = vmatmul.bf16.gmra.mxu0 %v801
        %v815 = vpop.f32.mrf.mxu0
        %v816 = vadd.f32 0.0, %v815
        %v817 = vpop.f32.mrf.mxu0
        %818 = vdwg.mxu0
        %v819 = vmul.f32 %v816, 0.25
        %v820 = vadd.f32 %v819, %v744
        %v821 = vsel %vm747, %v820, -inf
        %822 = vmax.xlane.f32.xlu0 %v821
        %v823 = vpop.xlane.xlu0 %822
        %v824 = vsub.f32 %v820, %v823
        %v825 = vmul.f32 %v824, 1.442695
        %v826 = vpow.pop %v825
        %v827 = vsel %vm747, %v826, 0.0
        %828 = vadd.xlane.f32.xlu0 %v827
        %v829 = vpop.xlane.xlu0 %828
        %v830 = vrcp.pop %v829
        %v831 = vmul.f32 %v829, %v830
        %v832 = vsub.f32 1.0, %v831
        %v833 = vmul.f32 %v830, %v832
        %v834 = vadd.f32 %v830, %v833
        %vm835 = vweird.f32 %v829
        %vm836 = vweird.f32 %v830
        %vm837 = vmor %vm835, %vm836
        %v838 = vsel %vm837, %v830, %v834
        %v839 = vand.u32 2147483647, %v829
        %vm840 = vcmp.eq.f32.partialorder %v839, 8.507059e+37
        %v841 = vand.u32 %v829, 2147483648
        %v842 = vor.u32 1.1754944e-38, %v841
        %v843 = vsel %vm840, %v842, %v838
        %v844 = vmul.f32 %v826, %v843
        %v845 = vpack.c.bf16 %v844, %v844
        %846 = vrot.lane.b32.xlu0 %v718, 48
        %v847 = vpop.permute.xlu0 %846
        %v849 = vsel %vm747, %v845, 0
        %v852 = vsel %vm778, %v847, 0
        %854 = vmatpush.bf16.msra.mxu0 0
        %855 = vmatpush.bf16.msra.mxu0 0
        %856 = vmatpush.bf16.msra.mxu0 0
        %857 = vmatpush.bf16.msra.mxu0 0
        %858 = vmatpush.bf16.msra.mxu0 0
        %859 = vmatpush.bf16.msra.mxu0 0
        %860 = vmatpush.bf16.msra.mxu0 0
        %861 = vmatpush.bf16.msra.mxu0 %v852
        %862 = vmatmul.bf16.gmra.mxu0 %v849
        %v863 = vpop.f32.mrf.mxu0
        %v864 = vadd.f32 0.0, %v863
        %v865 = vpop.f32.mrf.mxu0
        %866 = vdwg.mxu0
        %868 = vrot.lane.b32.xlu0 %v864, 16
        %v869 = vpop.permute.xlu0 %868
        %vm871 = vcmask 261248
        %872 = vst.msk [vmem:[#allocation2] sm:$0xff] %vm871, %v869
        %v873 = vld [vmem:[#allocation2] sm:$0xff]
        %v874 = vpack.c.bf16 %v873, %v873
        %v875 = vld [vmem:[%s6] sm:$0xf]
        %v876 = vld [vmem:[%s6 + $0x4] sm:$0xf]
        %v877 = vld [vmem:[%s6 + $0x8] sm:$0xf]
        %v878 = vld [vmem:[%s6 + $0xc] sm:$0xf]
        %v879 = vld [vmem:[%s7] sm:$0x1]
        %v881 = vperm.slane %v879, 0
        %v887 = vunpack.c.l.b16 %v875
        %v888 = vunpack.c.l.b16 %v876
        %v889 = vunpack.c.l.b16 %v877
        %v890 = vunpack.c.l.b16 %v878
        %v891 = vpack.c.b16 %v888, %v887
        %v892 = vpack.c.b16 %v890, %v889
        %v896 = vsel %vm642, %v874, 0
        %898 = vmatpush.bf16.msra.mxu0 0
        %899 = vmatpush.bf16.msra.mxu0 0
        %900 = vmatpush.bf16.msra.mxu0 0
        %901 = vmatpush.bf16.msra.mxu0 0
        %902 = vmatpush.bf16.msra.mxu0 0
        %903 = vmatpush.bf16.msra.mxu0 0
        %904 = vmatpush.bf16.msra.mxu0 %v892
        %905 = vmatpush.bf16.msra.mxu0 %v891
        %906 = vmatmul.bf16.gmra.mxu0 %v896
        %v907 = vpop.f32.mrf.mxu0
        %v908 = vadd.f32 %v881, %v907
        %v909 = vpop.f32.mrf.mxu0
        %910 = vdwg.mxu0
        %v911 = vadd.f32 %v679, %v908
        %v912 = vld [vmem:[%s8] sm:$0x1]
        %v913 = vld [vmem:[%s9] sm:$0x1]
        %v914 = vsel %vm642, %v911, 0.0
        %915 = vadd.xlane.f32.xlu0 %v914
        %v916 = vpop.xlane.xlu0 %915
        %v917 = vmul.f32 %v916, %v652
        %v918 = vsub.f32 %v911, %v917
        %v919 = vmul.f32 %v918, %v918
        %v920 = vsel %vm642, %v919, 0.0
        %921 = vadd.xlane.f32.xlu0 %v920
        %v922 = vpop.xlane.xlu0 %921
        %v923 = vmul.f32 %v922, %v652
        %v924 = vadd.f32 %v923, 1e-12
        %v925 = vrsqrt.pop %v924
        %v926 = vmul.f32 %v925, %v924
        %v927 = vmul.f32 %v926, %v925
        %v928 = vmul.f32 0.5, %v927
        %v929 = vsub.f32 1.5, %v928
        %v930 = vmul.f32 %v925, %v929
        %vm931 = vweird.f32 %v924
        %vm932 = vweird.f32 %v925
        %vm933 = vmor %vm931, %vm932
        %v934 = vsel %vm933, %v925, %v930
        %v935 = vmul.f32 %v918, %v934
        %v937 = vperm.slane %v912, 0
        %v939 = vmul.f32 %v935, %v937
        %v941 = vperm.slane %v913, 0
        %v943 = vadd.f32 %v939, %v941
        %v944 = vpack.c.bf16 %v943, %v943
        %v945 = vld [vmem:[%s10] sm:$0xf]
        %v946 = vld [vmem:[%s10 + $0x4] sm:$0xf]
        %v947 = vld [vmem:[%s10 + $0x8] sm:$0xf]
        %v948 = vld [vmem:[%s10 + $0xc] sm:$0xf]
        %v949 = vld [vmem:[%s11] sm:$0x1]
        %v951 = vperm.slane %v949, 0
        %v957 = vunpack.c.l.b16 %v945
        %v958 = vunpack.c.l.b16 %v946
        %v959 = vunpack.c.l.b16 %v947
        %v960 = vunpack.c.l.b16 %v948
        %v961 = vpack.c.b16 %v958, %v957
        %v962 = vpack.c.b16 %v960, %v959
        %v966 = vsel %vm642, %v944, 0
        %968 = vmatpush.bf16.msra.mxu0 0
        %969 = vmatpush.bf16.msra.mxu0 0
        %970 = vmatpush.bf16.msra.mxu0 0
        %971 = vmatpush.bf16.msra.mxu0 0
        %972 = vmatpush.bf16.msra.mxu0 0
        %973 = vmatpush.bf16.msra.mxu0 0
        %974 = vmatpush.bf16.msra.mxu0 %v962
        %975 = vmatpush.bf16.msra.mxu0 %v961
        %976 = vmatmul.bf16.gmra.mxu0 %v966
        %v977 = vpop.f32.mrf.mxu0
        %v978 = vadd.f32 %v951, %v977
        %v979 = vpop.f32.mrf.mxu0
        %980 = vdwg.mxu0
        %v981 = vmul.f32 %v978, 0.5
        %v982 = vmul.f32 %v978, 0.044715
        %v983 = vmul.f32 %v982, %v978
        %v984 = vmul.f32 %v983, %v978
        %v985 = vadd.f32 %v978, %v984
        %v986 = vmul.f32 %v985, 0.7978846
        %v987 = vtanh.pop %v986
        %v988 = vadd.f32 %v987, 1.0
        %v989 = vmul.f32 %v981, %v988
        %v990 = vpack.c.bf16 %v989, %v989
        %v991 = vld [vmem:[%s12] sm:$0xf]
        %v992 = vld [vmem:[%s12 + $0x4] sm:$0xf]
        %v993 = vld [vmem:[%s12 + $0x8] sm:$0xf]
        %v994 = vld [vmem:[%s12 + $0xc] sm:$0xf]
        %v995 = vld [vmem:[%s12 + $0x10] sm:$0xf]
        %v996 = vld [vmem:[%s12 + $0x14] sm:$0xf]
        %v997 = vld [vmem:[%s12 + $0x18] sm:$0xf]
        %v998 = vld [vmem:[%s12 + $0x1c] sm:$0xf]
        %v999 = vld [vmem:[%s13] sm:$0x1]
        %v1001 = vperm.slane %v999, 0
        %v1011 = vunpack.c.l.b16 %v991
        %v1012 = vunpack.c.l.b16 %v992
        %v1013 = vunpack.c.l.b16 %v993
        %v1014 = vunpack.c.l.b16 %v994
        %v1015 = vunpack.c.l.b16 %v995
        %v1016 = vunpack.c.l.b16 %v996
        %v1017 = vunpack.c.l.b16 %v997
        %v1018 = vunpack.c.l.b16 %v998
        %v1019 = vpack.c.b16 %v1012, %v1011
        %v1020 = vpack.c.b16 %v1014, %v1013
        %v1021 = vpack.c.b16 %v1016, %v1015
        %v1022 = vpack.c.b16 %v1018, %v1017
        %vm1027 = vcmask 523264
        %v1029 = vsel %vm1027, %v990, 0
        %1031 = vmatpush.bf16.msra.mxu0 0
        %1032 = vmatpush.bf16.msra.mxu0 0
        %1033 = vmatpush.bf16.msra.mxu0 0
        %1034 = vmatpush.bf16.msra.mxu0 0
        %1035 = vmatpush.bf16.msra.mxu0 %v1022
        %1036 = vmatpush.bf16.msra.mxu0 %v1021
        %1037 = vmatpush.bf16.msra.mxu0 %v1020
        %1038 = vmatpush.bf16.msra.mxu0 %v1019
        %1039 = vmatmul.bf16.gmra.mxu0 %v1029
        %v1040 = vpop.f32.mrf.mxu0
        %v1041 = vadd.f32 %v1001, %v1040
        %v1042 = vpop.f32.mrf.mxu0
        %1043 = vdwg.mxu0
        %v1044 = vadd.f32 %v943, %v1041
        %v1045 = vld [vmem:[%s14] sm:$0x1]
        %v1046 = vld [vmem:[%s15] sm:$0x1]
        %v1047 = vsel %vm642, %v1044, 0.0
        %1048 = vadd.xlane.f32.xlu0 %v1047
        %v1049 = vpop.xlane.xlu0 %1048
        %v1050 = vmul.f32 %v1049, %v652
        %v1051 = vsub.f32 %v1044, %v1050
        %v1052 = vmul.f32 %v1051, %v1051
        %v1053 = vsel %vm642, %v1052, 0.0
        %1054 = vadd.xlane.f32.xlu0 %v1053
        %v1055 = vpop.xlane.xlu0 %1054
        %v1056 = vmul.f32 %v1055, %v652
        %v1057 = vadd.f32 %v1056, 1e-12
        %v1058 = vrsqrt.pop %v1057
        %v1059 = vmul.f32 %v1058, %v1057
        %v1060 = vmul.f32 %v1059, %v1058
        %v1061 = vmul.f32 0.5, %v1060
        %v1062 = vsub.f32 1.5, %v1061
        %v1063 = vmul.f32 %v1058, %v1062
        %vm1064 = vweird.f32 %v1057
        %vm1065 = vweird.f32 %v1058
        %vm1066 = vmor %vm1064, %vm1065
        %v1067 = vsel %vm1066, %v1058, %v1063
        %v1068 = vmul.f32 %v1051, %v1067
        %v1070 = vperm.slane %v1045, 0
        %v1072 = vmul.f32 %v1068, %v1070
        %v1074 = vperm.slane %v1046, 0
        %v1076 = vadd.f32 %v1072, %v1074
        %v1077 = vpack.c.bf16 %v1076, %v1076
        %s1078 = scalar_lea.vmem %s4, 16
        %v1079 = vld [vmem:[%s1078] sm:$0xf]
        %v1080 = vld [vmem:[%s1078 + $0x4] sm:$0xf]
        %v1081 = vld [vmem:[%s1078 + $0x8] sm:$0xf]
        %v1082 = vld [vmem:[%s1078 + $0xc] sm:$0xf]
        %s1083 = scalar_lea.vmem %s5, 1
        %v1084 = vld [vmem:[%s1083] sm:$0x1]
        %v1086 = vperm.slane %v1084, 0
        %v1092 = vunpack.c.l.b16 %v1079
        %v1093 = vunpack.c.l.b16 %v1080
        %v1094 = vunpack.c.l.b16 %v1081
        %v1095 = vunpack.c.l.b16 %v1082
        %v1096 = vpack.c.b16 %v1093, %v1092
        %v1097 = vpack.c.b16 %v1095, %v1094
        %v1101 = vsel %vm642, %v1077, 0
        %1103 = vmatpush.bf16.msra.mxu0 0
        %1104 = vmatpush.bf16.msra.mxu0 0
        %1105 = vmatpush.bf16.msra.mxu0 0
        %1106 = vmatpush.bf16.msra.mxu0 0
        %1107 = vmatpush.bf16.msra.mxu0 0
        %1108 = vmatpush.bf16.msra.mxu0 0
        %1109 = vmatpush.bf16.msra.mxu0 %v1097
        %1110 = vmatpush.bf16.msra.mxu0 %v1096
        %1111 = vmatmul.bf16.gmra.mxu0 %v1101
        %v1112 = vpop.f32.mrf.mxu0
        %v1113 = vadd.f32 %v1086, %v1112
        %v1114 = vpop.f32.mrf.mxu0
        %1115 = vdwg.mxu0
        %v1116 = vpack.c.bf16 %v1113, %v1113
        %1118 = vrot.lane.b32.xlu0 %v1116, 96
        %v1119 = vpop.permute.xlu0 %1118
        %v1121 = vsel %vm722, %v1116, 0
        %v1124 = vsel %vm722, %v1119, 0
        %1126 = vmatpush.bf16.xpose.msra.mxu0 0
        %1127 = vmatpush.bf16.xpose.msra.mxu0 0
        %1128 = vmatpush.bf16.xpose.msra.mxu0 0
        %1129 = vmatpush.bf16.xpose.msra.mxu0 0
        %1130 = vmatpush.bf16.xpose.msra.mxu0 0
        %1131 = vmatpush.bf16.xpose.msra.mxu0 0
        %1132 = vmatpush.bf16.xpose.msra.mxu0 0
        %1133 = vmatpush.bf16.xpose.msra.mxu0 %v1124
        %1134 = vmatmul.bf16.gmra.mxu0 %v1121
        %v1135 = vpop.f32.mrf.mxu0
        %v1136 = vadd.f32 0.0, %v1135
        %v1137 = vpop.f32.mrf.mxu0
        %1138 = vdwg.mxu0
        %v1139 = vmul.f32 %v1136, 0.25
        %v1140 = vadd.f32 %v1139, %v744
        %v1141 = vsel %vm747, %v1140, -inf
        %1142 = vmax.xlane.f32.xlu0 %v1141
        %v1143 = vpop.xlane.xlu0 %1142
        %v1144 = vsub.f32 %v1140, %v1143
        %v1145 = vmul.f32 %v1144, 1.442695
        %v1146 = vpow.pop %v1145
        %v1147 = vsel %vm747, %v1146, 0.0
        %1148 = vadd.xlane.f32.xlu0 %v1147
        %v1149 = vpop.xlane.xlu0 %1148
        %v1150 = vrcp.pop %v1149
        %v1151 = vmul.f32 %v1149, %v1150
        %v1152 = vsub.f32 1.0, %v1151
        %v1153 = vmul.f32 %v1150, %v1152
        %v1154 = vadd.f32 %v1150, %v1153
        %vm1155 = vweird.f32 %v1149
        %vm1156 = vweird.f32 %v1150
        %vm1157 = vmor %vm1155, %vm1156
        %v1158 = vsel %vm1157, %v1150, %v1154
        %v1159 = vand.u32 2147483647, %v1149
        %vm1160 = vcmp.eq.f32.partialorder %v1159, 8.507059e+37
        %v1161 = vand.u32 %v1149, 2147483648
        %v1162 = vor.u32 1.1754944e-38, %v1161
        %v1163 = vsel %vm1160, %v1162, %v1158
        %v1164 = vmul.f32 %v1146, %v1163
        %v1165 = vpack.c.bf16 %v1164, %v1164
        %1166 = vrot.lane.b32.xlu0 %v1116, 64
        %v1167 = vpop.permute.xlu0 %1166
        %v1169 = vsel %vm747, %v1165, 0
        %v1172 = vsel %vm778, %v1167, 0
        %1174 = vmatpush.bf16.msra.mxu0 0
        %1175 = vmatpush.bf16.msra.mxu0 0
        %1176 = vmatpush.bf16.msra.mxu0 0
        %1177 = vmatpush.bf16.msra.mxu0 0
        %1178 = vmatpush.bf16.msra.mxu0 0
        %1179 = vmatpush.bf16.msra.mxu0 0
        %1180 = vmatpush.bf16.msra.mxu0 0
        %1181 = vmatpush.bf16.msra.mxu0 %v1172
        %1182 = vmatmul.bf16.gmra.mxu0 %v1169
        %v1183 = vpop.f32.mrf.mxu0
        %v1184 = vadd.f32 0.0, %v1183
        %v1185 = vpop.f32.mrf.mxu0
        %1186 = vdwg.mxu0
        %1187 = vst.msk [vmem:[#allocation2] sm:$0xff] %vm722, %v1184
        %1188 = vrot.lane.b32.xlu0 %v1116, 112
        %v1189 = vpop.permute.xlu0 %1188
        %1190 = vrot.lane.b32.xlu0 %v1116, 80
        %v1191 = vpop.permute.xlu0 %1190
        %v1193 = vsel %vm722, %v1189, 0
        %v1196 = vsel %vm722, %v1191, 0
        %1198 = vmatpush.bf16.xpose.msra.mxu0 0
        %1199 = vmatpush.bf16.xpose.msra.mxu0 0
        %1200 = vmatpush.bf16.xpose.msra.mxu0 0
        %1201 = vmatpush.bf16.xpose.msra.mxu0 0
        %1202 = vmatpush.bf16.xpose.msra.mxu0 0
        %1203 = vmatpush.bf16.xpose.msra.mxu0 0
        %1204 = vmatpush.bf16.xpose.msra.mxu0 0
        %1205 = vmatpush.bf16.xpose.msra.mxu0 %v1196
        %1206 = vmatmul.bf16.gmra.mxu0 %v1193
        %v1207 = vpop.f32.mrf.mxu0
        %v1208 = vadd.f32 0.0, %v1207
        %v1209 = vpop.f32.mrf.mxu0
        %1210 = vdwg.mxu0
        %v1211 = vmul.f32 %v1208, 0.25
        %v1212 = vadd.f32 %v1211, %v744
        %v1213 = vsel %vm747, %v1212, -inf
        %1214 = vmax.xlane.f32.xlu0 %v1213
        %v1215 = vpop.xlane.xlu0 %1214
        %v1216 = vsub.f32 %v1212, %v1215
        %v1217 = vmul.f32 %v1216, 1.442695
        %v1218 = vpow.pop %v1217
        %v1219 = vsel %vm747, %v1218, 0.0
        %1220 = vadd.xlane.f32.xlu0 %v1219
        %v1221 = vpop.xlane.xlu0 %1220
        %v1222 = vrcp.pop %v1221
        %v1223 = vmul.f32 %v1221, %v1222
        %v1224 = vsub.f32 1.0, %v1223
        %v1225 = vmul.f32 %v1222, %v1224
        %v1226 = vadd.f32 %v1222, %v1225
        %vm1227 = vweird.f32 %v1221
        %vm1228 = vweird.f32 %v1222
        %vm1229 = vmor %vm1227, %vm1228
        %v1230 = vsel %vm1229, %v1222, %v1226
        %v1231 = vand.u32 2147483647, %v1221
        %vm1232 = vcmp.eq.f32.partialorder %v1231, 8.507059e+37
        %v1233 = vand.u32 %v1221, 2147483648
        %v1234 = vor.u32 1.1754944e-38, %v1233
        %v1235 = vsel %vm1232, %v1234, %v1230
        %v1236 = vmul.f32 %v1218, %v1235
        %v1237 = vpack.c.bf16 %v1236, %v1236
        %1238 = vrot.lane.b32.xlu0 %v1116, 48
        %v1239 = vpop.permute.xlu0 %1238
        %v1241 = vsel %vm747, %v1237, 0
        %v1244 = vsel %vm778, %v1239, 0
        %1246 = vmatpush.bf16.msra.mxu0 0
        %1247 = vmatpush.bf16.msra.mxu0 0
        %1248 = vmatpush.bf16.msra.mxu0 0
        %1249 = vmatpush.bf16.msra.mxu0 0
        %1250 = vmatpush.bf16.msra.mxu0 0
        %1251 = vmatpush.bf16.msra.mxu0 0
        %1252 = vmatpush.bf16.msra.mxu0 0
        %1253 = vmatpush.bf16.msra.mxu0 %v1244
        %1254 = vmatmul.bf16.gmra.mxu0 %v1241
        %v1255 = vpop.f32.mrf.mxu0
        %v1256 = vadd.f32 0.0, %v1255
        %v1257 = vpop.f32.mrf.mxu0
        %1258 = vdwg.mxu0
        %1260 = vrot.lane.b32.xlu0 %v1256, 16
        %v1261 = vpop.permute.xlu0 %1260
        %1263 = vst.msk [vmem:[#allocation2] sm:$0xff] %vm871, %v1261
        %v1264 = vld [vmem:[#allocation2] sm:$0xff]
        %v1265 = vpack.c.bf16 %v1264, %v1264
        %s1266 = scalar_lea.vmem %s6, 16
        %v1267 = vld [vmem:[%s1266] sm:$0xf]
        %v1268 = vld [vmem:[%s1266 + $0x4] sm:$0xf]
        %v1269 = vld [vmem:[%s1266 + $0x8] sm:$0xf]
        %v1270 = vld [vmem:[%s1266 + $0xc] sm:$0xf]
        %s1271 = scalar_lea.vmem %s7, 1
        %v1272 = vld [vmem:[%s1271] sm:$0x1]
        %v1274 = vperm.slane %v1272, 0
        %v1280 = vunpack.c.l.b16 %v1267
        %v1281 = vunpack.c.l.b16 %v1268
        %v1282 = vunpack.c.l.b16 %v1269
        %v1283 = vunpack.c.l.b16 %v1270
        %v1284 = vpack.c.b16 %v1281, %v1280
        %v1285 = vpack.c.b16 %v1283, %v1282
        %v1289 = vsel %vm642, %v1265, 0
        %1291 = vmatpush.bf16.msra.mxu0 0
        %1292 = vmatpush.bf16.msra.mxu0 0
        %1293 = vmatpush.bf16.msra.mxu0 0
        %1294 = vmatpush.bf16.msra.mxu0 0
        %1295 = vmatpush.bf16.msra.mxu0 0
        %1296 = vmatpush.bf16.msra.mxu0 0
        %1297 = vmatpush.bf16.msra.mxu0 %v1285
        %1298 = vmatpush.bf16.msra.mxu0 %v1284
        %1299 = vmatmul.bf16.gmra.mxu0 %v1289
        %v1300 = vpop.f32.mrf.mxu0
        %v1301 = vadd.f32 %v1274, %v1300
        %v1302 = vpop.f32.mrf.mxu0
        %1303 = vdwg.mxu0
        %v1304 = vadd.f32 %v1076, %v1301
        %s1305 = scalar_lea.vmem %s8, 1
        %v1306 = vld [vmem:[%s1305] sm:$0x1]
        %s1307 = scalar_lea.vmem %s9, 1
        %v1308 = vld [vmem:[%s1307] sm:$0x1]
        %v1309 = vsel %vm642, %v1304, 0.0
        %1310 = vadd.xlane.f32.xlu0 %v1309
        %v1311 = vpop.xlane.xlu0 %1310
        %v1312 = vmul.f32 %v1311, %v652
        %v1313 = vsub.f32 %v1304, %v1312
        %v1314 = vmul.f32 %v1313, %v1313
        %v1315 = vsel %vm642, %v1314, 0.0
        %1316 = vadd.xlane.f32.xlu0 %v1315
        %v1317 = vpop.xlane.xlu0 %1316
        %v1318 = vmul.f32 %v1317, %v652
        %v1319 = vadd.f32 %v1318, 1e-12
        %v1320 = vrsqrt.pop %v1319
        %v1321 = vmul.f32 %v1320, %v1319
        %v1322 = vmul.f32 %v1321, %v1320
        %v1323 = vmul.f32 0.5, %v1322
        %v1324 = vsub.f32 1.5, %v1323
        %v1325 = vmul.f32 %v1320, %v1324
        %vm1326 = vweird.f32 %v1319
        %vm1327 = vweird.f32 %v1320
        %vm1328 = vmor %vm1326, %vm1327
        %v1329 = vsel %vm1328, %v1320, %v1325
        %v1330 = vmul.f32 %v1313, %v1329
        %v1332 = vperm.slane %v1306, 0
        %v1334 = vmul.f32 %v1330, %v1332
        %v1336 = vperm.slane %v1308, 0
        %v1338 = vadd.f32 %v1334, %v1336
        %v1339 = vpack.c.bf16 %v1338, %v1338
        %s1340 = scalar_lea.vmem %s10, 16
        %v1341 = vld [vmem:[%s1340] sm:$0xf]
        %v1342 = vld [vmem:[%s1340 + $0x4] sm:$0xf]
        %v1343 = vld [vmem:[%s1340 + $0x8] sm:$0xf]
        %v1344 = vld [vmem:[%s1340 + $0xc] sm:$0xf]
        %s1345 = scalar_lea.vmem %s11, 1
        %v1346 = vld [vmem:[%s1345] sm:$0x1]
        %v1348 = vperm.slane %v1346, 0
        %v1354 = vunpack.c.l.b16 %v1341
        %v1355 = vunpack.c.l.b16 %v1342
        %v1356 = vunpack.c.l.b16 %v1343
        %v1357 = vunpack.c.l.b16 %v1344
        %v1358 = vpack.c.b16 %v1355, %v1354
        %v1359 = vpack.c.b16 %v1357, %v1356
        %v1363 = vsel %vm642, %v1339, 0
        %1365 = vmatpush.bf16.msra.mxu0 0
        %1366 = vmatpush.bf16.msra.mxu0 0
        %1367 = vmatpush.bf16.msra.mxu0 0
        %1368 = vmatpush.bf16.msra.mxu0 0
        %1369 = vmatpush.bf16.msra.mxu0 0
        %1370 = vmatpush.bf16.msra.mxu0 0
        %1371 = vmatpush.bf16.msra.mxu0 %v1359
        %1372 = vmatpush.bf16.msra.mxu0 %v1358
        %1373 = vmatmul.bf16.gmra.mxu0 %v1363
        %v1374 = vpop.f32.mrf.mxu0
        %v1375 = vadd.f32 %v1348, %v1374
        %v1376 = vpop.f32.mrf.mxu0
        %1377 = vdwg.mxu0
        %v1378 = vmul.f32 %v1375, 0.5
        %v1379 = vmul.f32 %v1375, 0.044715
        %v1380 = vmul.f32 %v1379, %v1375
        %v1381 = vmul.f32 %v1380, %v1375
        %v1382 = vadd.f32 %v1375, %v1381
        %v1383 = vmul.f32 %v1382, 0.7978846
        %v1384 = vtanh.pop %v1383
        %v1385 = vadd.f32 %v1384, 1.0
        %v1386 = vmul.f32 %v1378, %v1385
        %v1387 = vpack.c.bf16 %v1386, %v1386
        %s1388 = scalar_lea.vmem %s12, 32
        %v1389 = vld [vmem:[%s1388] sm:$0xf]
        %v1390 = vld [vmem:[%s1388 + $0x4] sm:$0xf]
        %v1391 = vld [vmem:[%s1388 + $0x8] sm:$0xf]
        %v1392 = vld [vmem:[%s1388 + $0xc] sm:$0xf]
        %v1393 = vld [vmem:[%s1388 + $0x10] sm:$0xf]
        %v1394 = vld [vmem:[%s1388 + $0x14] sm:$0xf]
        %v1395 = vld [vmem:[%s1388 + $0x18] sm:$0xf]
        %v1396 = vld [vmem:[%s1388 + $0x1c] sm:$0xf]
        %s1397 = scalar_lea.vmem %s13, 1
        %v1398 = vld [vmem:[%s1397] sm:$0x1]
        %v1400 = vperm.slane %v1398, 0
        %v1410 = vunpack.c.l.b16 %v1389
        %v1411 = vunpack.c.l.b16 %v1390
        %v1412 = vunpack.c.l.b16 %v1391
        %v1413 = vunpack.c.l.b16 %v1392
        %v1414 = vunpack.c.l.b16 %v1393
        %v1415 = vunpack.c.l.b16 %v1394
        %v1416 = vunpack.c.l.b16 %v1395
        %v1417 = vunpack.c.l.b16 %v1396
        %v1418 = vpack.c.b16 %v1411, %v1410
        %v1419 = vpack.c.b16 %v1413, %v1412
        %v1420 = vpack.c.b16 %v1415, %v1414
        %v1421 = vpack.c.b16 %v1417, %v1416
        %v1427 = vsel %vm1027, %v1387, 0
        %1429 = vmatpush.bf16.msra.mxu0 0
        %1430 = vmatpush.bf16.msra.mxu0 0
        %1431 = vmatpush.bf16.msra.mxu0 0
        %1432 = vmatpush.bf16.msra.mxu0 0
        %1433 = vmatpush.bf16.msra.mxu0 %v1421
        %1434 = vmatpush.bf16.msra.mxu0 %v1420
        %1435 = vmatpush.bf16.msra.mxu0 %v1419
        %1436 = vmatpush.bf16.msra.mxu0 %v1418
        %1437 = vmatmul.bf16.gmra.mxu0 %v1427
        %v1438 = vpop.f32.mrf.mxu0
        %v1439 = vadd.f32 %v1400, %v1438
        %v1440 = vpop.f32.mrf.mxu0
        %1441 = vdwg.mxu0
        %v1442 = vadd.f32 %v1338, %v1439
        %s1443 = scalar_lea.vmem %s14, 1
        %v1444 = vld [vmem:[%s1443] sm:$0x1]
        %s1445 = scalar_lea.vmem %s15, 1
        %v1446 = vld [vmem:[%s1445] sm:$0x1]
        %v1447 = vsel %vm642, %v1442, 0.0
        %1448 = vadd.xlane.f32.xlu0 %v1447
        %v1449 = vpop.xlane.xlu0 %1448
        %v1450 = vmul.f32 %v1449, %v652
        %v1451 = vsub.f32 %v1442, %v1450
        %v1452 = vmul.f32 %v1451, %v1451
        %v1453 = vsel %vm642, %v1452, 0.0
        %1454 = vadd.xlane.f32.xlu0 %v1453
        %v1455 = vpop.xlane.xlu0 %1454
        %v1456 = vmul.f32 %v1455, %v652
        %v1457 = vadd.f32 %v1456, 1e-12
        %v1458 = vrsqrt.pop %v1457
        %v1459 = vmul.f32 %v1458, %v1457
        %v1460 = vmul.f32 %v1459, %v1458
        %v1461 = vmul.f32 0.5, %v1460
        %v1462 = vsub.f32 1.5, %v1461
        %v1463 = vmul.f32 %v1458, %v1462
        %vm1464 = vweird.f32 %v1457
        %vm1465 = vweird.f32 %v1458
        %vm1466 = vmor %vm1464, %vm1465
        %v1467 = vsel %vm1466, %v1458, %v1463
        %v1468 = vmul.f32 %v1451, %v1467
        %v1470 = vperm.slane %v1444, 0
        %v1472 = vmul.f32 %v1468, %v1470
        %v1474 = vperm.slane %v1446, 0
        %v1476 = vadd.f32 %v1472, %v1474
        %v1477 = vsel %vm642, %v1476, 0.0
        %v1478 = vrot.slane %v1477, 4
        %v1479 = vadd.f32 %v1477, %v1478
        %v1480 = vrot.slane %v1479, 2
        %v1481 = vadd.f32 %v1479, %v1480
        %v1482 = vrot.slane %v1481, 1
        %v1483 = vadd.f32 %v1481, %v1482
        %v1484 = vrcp.pop 8.0
        %v1485 = vmul.f32 8.0, %v1484
        %v1486 = vsub.f32 1.0, %v1485
        %v1487 = vmul.f32 %v1484, %v1486
        %v1488 = vadd.f32 %v1484, %v1487
        %vm1489 = vweird.f32 %v1484
        %v1490 = vsel %vm1489, %v1484, %v1488
        %v1491 = vmul.f32 %v1483, %v1490
        %v1492 = vpack.c.bf16 %v1491, %v1491
        %v1493 = vld [vmem:[%s16] sm:$0xf]
        %v1494 = vld [vmem:[%s16 + $0x4] sm:$0xf]
        %v1495 = vld [vmem:[%s16 + $0x8] sm:$0xf]
        %v1496 = vld [vmem:[%s16 + $0xc] sm:$0xf]
        %v1497 = vld [vmem:[%s17] sm:$0x1]
        %v1502 = vunpack.c.l.b16 %v1493
        %v1503 = vunpack.c.l.b16 %v1494
        %v1504 = vunpack.c.l.b16 %v1495
        %v1505 = vunpack.c.l.b16 %v1496
        %v1506 = vpack.c.b16 %v1503, %v1502
        %v1507 = vpack.c.b16 %v1505, %v1504
        %v1511 = vsel %vm642, %v1492, 0
        %1513 = vmatpush.bf16.msra.mxu0 0
        %1514 = vmatpush.bf16.msra.mxu0 0
        %1515 = vmatpush.bf16.msra.mxu0 0
        %1516 = vmatpush.bf16.msra.mxu0 0
        %1517 = vmatpush.bf16.msra.mxu0 0
        %1518 = vmatpush.bf16.msra.mxu0 0
        %1519 = vmatpush.bf16.msra.mxu0 %v1507
        %1520 = vmatpush.bf16.msra.mxu0 %v1506
        %1521 = vmatmul.bf16.gmra.mxu0 %v1511
        %v1522 = vpop.f32.mrf.mxu0
        %v1523 = vadd.f32 %v1497, %v1522
        %v1524 = vpop.f32.mrf.mxu0
        %1525 = vdwg.mxu0
        %v1526 = vmax.f32 %v1523, 0.0
        %v1527 = vpack.c.bf16 %v1526, %v1526
        %v1528 = vld [vmem:[%s18] sm:$0xf]
        %v1529 = vld [vmem:[%s18 + $0x4] sm:$0xf]
        %v1530 = vld [vmem:[%s18 + $0x8] sm:$0xf]
        %v1531 = vld [vmem:[%s18 + $0xc] sm:$0xf]
        %v1532 = vld [vmem:[%s18 + $0x10] sm:$0xf]
        %v1533 = vld [vmem:[%s18 + $0x14] sm:$0xf]
        %v1534 = vld [vmem:[%s18 + $0x18] sm:$0xf]
        %v1535 = vld [vmem:[%s18 + $0x1c] sm:$0xf]
        %v1536 = vld [vmem:[%s18 + $0x20] sm:$0xf]
        %v1537 = vld [vmem:[%s18 + $0x24] sm:$0xf]
        %v1538 = vld [vmem:[%s18 + $0x28] sm:$0xf]
        %v1539 = vld [vmem:[%s18 + $0x2c] sm:$0xf]
        %v1540 = vld [vmem:[%s18 + $0x30] sm:$0xf]
        %v1541 = vld [vmem:[%s18 + $0x34] sm:$0xf]
        %v1542 = vld [vmem:[%s18 + $0x38] sm:$0xf]
        %v1543 = vld [vmem:[%s18 + $0x3c] sm:$0xf]
        %v1544 = vld [vmem:[%s19] sm:$0x1]
        %v1561 = vunpack.c.l.b16 %v1528
        %v1562 = vunpack.c.l.b16 %v1529
        %v1563 = vunpack.c.l.b16 %v1530
        %v1564 = vunpack.c.l.b16 %v1531
        %v1565 = vunpack.c.l.b16 %v1532
        %v1566 = vunpack.c.l.b16 %v1533
        %v1567 = vunpack.c.l.b16 %v1534
        %v1568 = vunpack.c.l.b16 %v1535
        %v1569 = vunpack.c.l.b16 %v1536
        %v1570 = vunpack.c.l.b16 %v1537
        %v1571 = vunpack.c.l.b16 %v1538
        %v1572 = vunpack.c.l.b16 %v1539
        %v1573 = vunpack.c.l.b16 %v1540
        %v1574 = vunpack.c.l.b16 %v1541
        %v1575 = vunpack.c.l.b16 %v1542
        %v1576 = vunpack.c.l.b16 %v1543
        %v1577 = vpack.c.b16 %v1562, %v1561
        %v1578 = vpack.c.b16 %v1564, %v1563
        %v1579 = vpack.c.b16 %v1566, %v1565
        %v1580 = vpack.c.b16 %v1568, %v1567
        %v1581 = vpack.c.b16 %v1570, %v1569
        %v1582 = vpack.c.b16 %v1572, %v1571
        %v1583 = vpack.c.b16 %v1574, %v1573
        %v1584 = vpack.c.b16 %v1576, %v1575
        %1593 = vmatpush.bf16.msra.mxu0 %v1584
        %1594 = vmatpush.bf16.msra.mxu0 %v1583
        %1595 = vmatpush.bf16.msra.mxu0 %v1582
        %1596 = vmatpush.bf16.msra.mxu0 %v1581
        %1597 = vmatpush.bf16.msra.mxu0 %v1580
        %1598 = vmatpush.bf16.msra.mxu0 %v1579
        %1599 = vmatpush.bf16.msra.mxu0 %v1578
        %1600 = vmatpush.bf16.msra.mxu0 %v1577
        %1601 = vmatmul.bf16.gmra.mxu0 %v1527
        %v1602 = vpop.f32.mrf.mxu0
        %v1603 = vadd.f32 %v1544, %v1602
        %v1604 = vpop.f32.mrf.mxu0
        %1605 = vdwg.mxu0
        %vm1606 = vcmask 188416
        %1607 = vst.msk [vmem:[%s630] sm:$0x1] %vm1606, %v1603
        %s1608 = sand.u32 %s472, 1
        %s1609 = scalar_lea.sflag [#allocation4], %s1608
        %s1610 = sand.u32 %s472, 1
        %s1611 = scalar_lea.vmem [#allocation3], %s1610
        // Predicated region
        $region101: #{bert_classifier_forward.1} parent=99 // pred_check
          %p1612 = pneg %p482
        $region102: #{bert_classifier_forward.1} parent=99 // pred_check_branch
          %1614 = sbr.rel (%p1612) target = $region104
        $region103: #{bert_classifier_forward.1} parent=99 // pred_region
          %1616 = vsyncadd %s1609, 0
          %s1617 = scalar_lea.hbm %s20, %s34
          %s1619 = sshll.u32 %s1611, 4
          %s1620 = int_to_ptr.vmem [resolvable:$true] %s1619
          %s1621 = sshll.u32 %s1617, 4
          %s1622 = int_to_ptr.hbm [resolvable:$true] %s1621
          %1624 = dma.vmem_to_hbm [thread:$0]  %s1620, 16, %s1622, %s1609
        $region104: #{bert_classifier_forward.1} parent=99 // pred_fallthru
          _
      $region100: #{bert_classifier_forward.1} parent=5 // pred_fallthru
        _
      %p1625 = scmp.le.s32.totalorder 2, %s29
      // Predicated region
      $region105: #{bert_classifier_forward.1} parent=5 // pred_check
        %p1626 = pneg %p1625
      $region106: #{bert_classifier_forward.1} parent=5 // pred_check_branch
        %1628 = sbr.rel (%p1626) target = $region108
      $region107: #{bert_classifier_forward.1} parent=5 // pred_region
        %s1629 = ssub.s32 %s29, 2
        // Predicated region
        $region109: #{bert_classifier_forward.1} parent=107 // pred_check
          %p1630 = pneg %p488
        $region110: #{bert_classifier_forward.1} parent=107 // pred_check_branch
          %1632 = sbr.rel (%p1630) target = $region112
        $region111: #{bert_classifier_forward.1} parent=107 // pred_region
          %s1633 = sand.u32 %s473, 1
          %s1634 = scalar_lea.sflag [#allocation4], %s1633
          %s1635 = sand.u32 %s473, 1
          %s1636 = scalar_lea.vmem [#allocation3], %s1635
          %1638 = dma.done %s1634, 16
        $region112: #{bert_classifier_forward.1} parent=107 // pred_fallthru
          _
      $region108: #{bert_classifier_forward.1} parent=5 // pred_fallthru
        _
    $region6: #{bert_classifier_forward.1} parent=1 // loop_footer
      %s33 = sadd.s32 1, %s29
    $region7: #{bert_classifier_forward.1} parent=1 // loop_footer_branch
      %28 = sbr.rel target = $region3
    $region8: #{bert_classifier_forward.1} parent=1 // loop_exit
      _
    %1639 = vsyncpa [#allocation4], 1
    %s1640 = scalar_lea.sflag [#allocation4], 1
    %1641 = vsyncpa %s1640, 1

</llo_original>
